<compile_context>
chip_gen: v5e
topology: v5e:2x2
jax: 0.10.0
libtpu: 0.0.40
codegen_flags: <defaults>
</compile_context>

<pallas_src>
import functools

import jax
import jax.numpy as jnp
from jax.experimental import pallas as pl
from jax.experimental.pallas import tpu as pltpu


def _round_up(a, b):
    return (a + b - 1) // b * b


def _tsa_corr_kernel(feat_m, feat_h, mw_ref, o_ref, *, cinp, wpad, tm):
    """One pixel tile.

    feat_m : (2*cinp, tm)  main tile of the padded, flattened [cur; prev] features
    feat_h : (2*cinp, wh)  halo tile (the next wh lanes of the same array)
    mw_ref : (kr, kr)      collapsed bilinear weights, kr = 9*cinp + 1
    o_ref  : (1, tm)       sigmoid(corr) at padded-flat pixel positions
    """
    kr = 9 * cinp + 1
    both = jnp.concatenate([feat_m[...], feat_h[...]], axis=-1)   # (2*cinp, tm+wh)

    # Only 3 distinct lane shifts (column offsets j = 0,1,2); the row offsets
    # i*wpad become lane-aligned slices of these when wpad % 128 == 0.
    span = tm + 2 * wpad
    shifted = [both[:, j:j + span] for j in range(3)]

    cur_taps, prev_taps = [], []
    for i in range(3):
        for j in range(3):
            tap = shifted[j][:, i * wpad:i * wpad + tm]           # (2*cinp, tm)
            cur_taps.append(tap[:cinp])                           # cur channels
            prev_taps.append(tap[cinp:])                          # prev channels

    ones = jnp.ones((1, tm), feat_m.dtype)                        # bias row
    pc = jnp.concatenate(cur_taps + [ones], axis=0)               # (kr, tm) bf16

    # Single-pass bf16 MXU matmul, f32 accumulation.
    t = jnp.dot(mw_ref[...], pc, preferred_element_type=jnp.float32)   # (kr, tm)

    # corr = pp'^T t, accumulated per tap so pp is never materialized.
    corr = t[kr - 1:kr, :]                                        # bias row of pp = 1
    for k in range(9):
        corr = corr + jnp.sum(
            t[k * cinp:(k + 1) * cinp, :] * prev_taps[k].astype(jnp.float32),
            axis=0, keepdims=True)
    o_ref[...] = jax.nn.sigmoid(corr).astype(o_ref.dtype)


@functools.partial(jax.jit, static_argnames=("tm", "compute_dtype"))
def temporal_stabilization(cur_raw_feats, prev_raw_feats, x, w1, b1, w2, b2,
                           *, tm=8192, compute_dtype=jnp.bfloat16):
    """Forward pass equivalent to TemporalStabilization.forward (NCHW in/out).

    cur_raw_feats / prev_raw_feats : (B, Cin, H, W) float32
    x                              : (B, C, H, W)  float32
    w1, w2 : (num_feat, Cin, 3, 3) PyTorch OIHW conv weights;  b1, b2 : (num_feat,)
    """
    bsz, _, hh, ww = x.shape
    nf, cin, kh, kw = w1.shape
    assert (kh, kw) == (3, 3)

    # ---- layout constants ---------------------------------------------------
    # bf16 packs 16 rows / vreg -> pad channel groups to 16 for aligned tap copies.
    # TODO(synk): on v5e keep cinp == cin (K <= 128 keeps its 128-wide MXU single-pass).
    cinp = _round_up(cin, 16)
    kr = kh * kw * cinp + 1
    wpad_raw = ww + 2
    # Lane-align the row stride for wide images (<= 4/3 HBM inflation) so the
    # per-tap row shifts i*wpad are aligned; keep it tight for tiny images.
    wpad = _round_up(wpad_raw, 128) if wpad_raw >= 96 else wpad_raw

    # ---- collapse conv1/conv2 + biases + channel-sum into one (kr,kr) form ----
    # Flatten weights in (ki, kj, cin) order to match the in-kernel patch order.
    def _flat_w(w):
        wp = jnp.pad(w.astype(jnp.float32),
                     ((0, 0), (0, cinp - cin), (0, 0), (0, 0)))
        return jnp.transpose(wp, (0, 2, 3, 1)).reshape(nf, kr - 1)

    w1m, w2m = _flat_w(w1), _flat_w(w2)
    b1f, b2f = b1.astype(jnp.float32), b2.astype(jnp.float32)
    # Tiny one-time prep; exact f32 accumulation via multiply+sum.
    a_mat = jnp.sum(w1m[:, :, None] * w2m[:, None, :], axis=0)    # (kr-1, kr-1)
    v1 = jnp.sum(w1m * b2f[:, None], axis=0)                      # coeff of pc
    v2 = jnp.sum(w2m * b1f[:, None], axis=0)                      # coeff of pp
    c0 = jnp.sum(b1f * b2f)                                       # scalar
    mw = jnp.concatenate(
        [jnp.concatenate([a_mat.T, v2[:, None]], axis=1),
         jnp.concatenate([v1[None, :], c0[None, None]], axis=1)],
        axis=0).astype(compute_dtype)                             # (kr, kr)

    # ---- tiling of the flattened, spatially padded pixel axis -----------------
    wh = _round_up(2 * wpad + 2, 128)       # halo lanes (covers the largest tap shift)
    p_need = hh * wpad                      # covers every valid output base
    max_lanes = 16384                       # keeps live VMEM well under v7x's 64 MiB
    tm_goal = max(min(max(tm, 4 * wh), max_lanes), wh)
    tm_eff = min((tm_goal // wh) * wh, _round_up(p_need, wh))     # multiple of wh
    n_tiles = -(-p_need // tm_eff)
    l_main = n_tiles * tm_eff
    rows_total = -(-(l_main + wh) // wpad)  # padded rows incl. halo slack
    halo_blocks = tm_eff // wh

    # ---- pad, stack cur/prev on the channel axis, cast, flatten pixels --------
    def _pad_c(raw):
        return jnp.pad(raw.astype(compute_dtype),
                       ((0, 0), (0, cinp - cin), (0, 0), (0, 0)))

    feats = jnp.concatenate([_pad_c(cur_raw_feats), _pad_c(prev_raw_feats)], axis=1)
    feats = jnp.pad(feats, ((0, 0), (0, 0),
                            (1, rows_total - hh - 1), (1, wpad - ww - 1)))
    feats = feats.reshape(bsz, 2 * cinp, rows_total * wpad)       # (B, 2*cinp, L) bf16

    kernel = functools.partial(_tsa_corr_kernel, cinp=cinp, wpad=wpad, tm=tm_eff)

    prob_flat = pl.pallas_call(
        kernel,
        out_shape=jax.ShapeDtypeStruct((bsz, 1, l_main), jnp.float32),
        grid_spec=pltpu.PrefetchScalarGridSpec(
            num_scalar_prefetch=0,
            grid=(bsz, n_tiles),
            in_specs=[
                # main tile of the stacked [cur; prev] padded features
                pl.BlockSpec((None, 2 * cinp, tm_eff), lambda bi, ti: (bi, 0, ti)),
                # halo tile: the next wh lanes of the same array
                pl.BlockSpec((None, 2 * cinp, wh),
                             lambda bi, ti: (bi, 0, (ti + 1) * halo_blocks)),
                # collapsed bilinear weights (resident across the grid)
                pl.BlockSpec((kr, kr), lambda bi, ti: (0, 0)),
            ],
            out_specs=pl.BlockSpec((None, 1, tm_eff), lambda bi, ti: (bi, 0, ti)),
        ),
        compiler_params=pltpu.CompilerParams(
            dimension_semantics=("parallel", "parallel"),
            vmem_limit_bytes=64 * 1024 * 1024),
    )(feats, feats, mw)

    # Valid outputs sit at padded-flat positions y*wpad + x with y < H, x < W.
    prob = prob_flat[:, 0, :p_need].reshape(bsz, hh, wpad)[:, :, :ww]
    # Tiny broadcast modulation left to XLA (fuses with the slice above).
    return x * prob[:, None, :, :]


def _reference(cur_raw_feats, prev_raw_feats, x, w1, b1, w2, b2):
    """Pure-JAX f32 reference mirroring the PyTorch forward (NCHW conv)."""
    dn = jax.lax.conv_dimension_numbers(cur_raw_feats.shape, w1.shape,
                                        ("NCHW", "OIHW", "NCHW"))
    prec = jax.lax.Precision.HIGHEST
    cur_emb = jax.lax.conv_general_dilated(
        cur_raw_feats, w1, (1, 1), ((1, 1), (1, 1)),
        dimension_numbers=dn, precision=prec) + b1[None, :, None, None]
    prev_emb = jax.lax.conv_general_dilated(
        prev_raw_feats, w2, (1, 1), ((1, 1), (1, 1)),
        dimension_numbers=dn, precision=prec) + b2[None, :, None, None]
    corr = jnp.sum(prev_emb * cur_emb, axis=1, keepdims=True)
    return x * jax.nn.sigmoid(corr)


if __name__ == "__main__":
    def run_case(key, B, C, H, W, input_feat=9, num_feat=32):
        k_cur, k_prev, k_x, k_w1, k_b1, k_w2, k_b2 = jax.random.split(key, 7)
        cur_raw = jax.random.normal(k_cur, (B, input_feat, H, W), jnp.float32)
        prev_raw = jax.random.normal(k_prev, (B, input_feat, H, W), jnp.float32)
        x = jax.random.normal(k_x, (B, C, H, W), jnp.float32)

        fan_in = input_feat * 3 * 3
        scale = 1.0 / float(fan_in) ** 0.5
        w1 = jax.random.uniform(k_w1, (num_feat, input_feat, 3, 3),
                                jnp.float32, -scale, scale)
        b1 = jax.random.uniform(k_b1, (num_feat,), jnp.float32, -scale, scale)
        w2 = jax.random.uniform(k_w2, (num_feat, input_feat, 3, 3),
                                jnp.float32, -scale, scale)
        b2 = jax.random.uniform(k_b2, (num_feat,), jnp.float32, -scale, scale)

        out = jax.block_until_ready(
            temporal_stabilization(cur_raw, prev_raw, x, w1, b1, w2, b2))
        ref = _reference(cur_raw, prev_raw, x, w1, b1, w2, b2)
        assert out.shape == (B, C, H, W)
        # bf16 feature storage + single-pass bf16 MXU operands (per perf review)
        # give ~1e-3-level corr error; 3e-2 abs/rel on the modulated output is
        # the honest envelope vs the f32 (HIGHEST precision) reference.
        assert jnp.allclose(out, ref, atol=3e-2, rtol=3e-2), \
            float(jnp.max(jnp.abs(out - ref)))

    root = jax.random.PRNGKey(0)
    k0, k1 = jax.random.split(root)
    run_case(k0, B=2, C=4, H=16, W=16)     # primary shapes from the spec
    run_case(k1, B=1, C=3, H=7, W=5)       # ragged / tiny shapes
    print("KERNEL_OK")
</pallas_src>

<mosaic_0001>
module attributes {stable_mosaic.version = 11 : i64} {
  func.func @_tsa_corr_kernel(%arg0: i32, %arg1: i32, %arg2: memref<1x32x384xbf16, #tpu.memory_space<vmem>>, %arg3: memref<1x32x128xbf16, #tpu.memory_space<vmem>>, %arg4: memref<145x145xbf16, #tpu.memory_space<vmem>>, %arg5: memref<1x1x384xf32, #tpu.memory_space<vmem>>) attributes {dimension_semantics = [#tpu.dimension_semantics<parallel>, #tpu.dimension_semantics<parallel>], iteration_bounds = array<i64: 2, 1>, scalar_prefetch = 0 : i64, scratch_operands = 0 : i64, tpu.core_type = #tpu.core_type<tc>, window_params = [{transform_indices = @transform_0, window_bounds = array<i64: 1, 32, 384>}, {transform_indices = @transform_1, window_bounds = array<i64: 1, 32, 128>}, {pipeline_mode = #tpu.pipeline_mode<synchronous>, transform_indices = @transform_2, window_bounds = array<i64: 145, 145>}, {transform_indices = @transform_3, window_bounds = array<i64: 1, 1, 384>}]} {
    %c0 = arith.constant 0 : index
    %c0_0 = arith.constant 0 : index
    %c0_1 = arith.constant 0 : index
    %0 = vector.load %arg2[%c0, %c0_0, %c0_1] : memref<1x32x384xbf16, #tpu.memory_space<vmem>>, vector<1x32x384xbf16>
    %1 = vector.shape_cast %0 : vector<1x32x384xbf16> to vector<32x384xbf16>
    %c0_2 = arith.constant 0 : index
    %c0_3 = arith.constant 0 : index
    %c0_4 = arith.constant 0 : index
    %2 = vector.load %arg3[%c0_2, %c0_3, %c0_4] : memref<1x32x128xbf16, #tpu.memory_space<vmem>>, vector<1x32x128xbf16>
    %3 = vector.shape_cast %2 : vector<1x32x128xbf16> to vector<32x128xbf16>
    %4 = tpu.concatenate %1, %3 in 1 : vector<32x384xbf16>, vector<32x128xbf16> -> vector<32x512xbf16>
    %5 = vector.extract_strided_slice %4 {offsets = [0, 0], sizes = [32, 420], strides = [1, 1]} : vector<32x512xbf16> to vector<32x420xbf16>
    %6 = vector.extract_strided_slice %4 {offsets = [0, 1], sizes = [32, 420], strides = [1, 1]} : vector<32x512xbf16> to vector<32x420xbf16>
    %7 = vector.extract_strided_slice %4 {offsets = [0, 2], sizes = [32, 420], strides = [1, 1]} : vector<32x512xbf16> to vector<32x420xbf16>
    %8 = vector.extract_strided_slice %5 {offsets = [0, 0], sizes = [32, 384], strides = [1, 1]} : vector<32x420xbf16> to vector<32x384xbf16>
    %9 = vector.extract_strided_slice %8 {offsets = [0, 0], sizes = [16, 384], strides = [1, 1]} : vector<32x384xbf16> to vector<16x384xbf16>
    %10 = vector.extract_strided_slice %8 {offsets = [16, 0], sizes = [16, 384], strides = [1, 1]} : vector<32x384xbf16> to vector<16x384xbf16>
    %11 = vector.extract_strided_slice %6 {offsets = [0, 0], sizes = [32, 384], strides = [1, 1]} : vector<32x420xbf16> to vector<32x384xbf16>
    %12 = vector.extract_strided_slice %11 {offsets = [0, 0], sizes = [16, 384], strides = [1, 1]} : vector<32x384xbf16> to vector<16x384xbf16>
    %13 = vector.extract_strided_slice %11 {offsets = [16, 0], sizes = [16, 384], strides = [1, 1]} : vector<32x384xbf16> to vector<16x384xbf16>
    %14 = vector.extract_strided_slice %7 {offsets = [0, 0], sizes = [32, 384], strides = [1, 1]} : vector<32x420xbf16> to vector<32x384xbf16>
    %15 = vector.extract_strided_slice %14 {offsets = [0, 0], sizes = [16, 384], strides = [1, 1]} : vector<32x384xbf16> to vector<16x384xbf16>
    %16 = vector.extract_strided_slice %14 {offsets = [16, 0], sizes = [16, 384], strides = [1, 1]} : vector<32x384xbf16> to vector<16x384xbf16>
    %17 = vector.extract_strided_slice %5 {offsets = [0, 18], sizes = [32, 384], strides = [1, 1]} : vector<32x420xbf16> to vector<32x384xbf16>
    %18 = vector.extract_strided_slice %17 {offsets = [0, 0], sizes = [16, 384], strides = [1, 1]} : vector<32x384xbf16> to vector<16x384xbf16>
    %19 = vector.extract_strided_slice %17 {offsets = [16, 0], sizes = [16, 384], strides = [1, 1]} : vector<32x384xbf16> to vector<16x384xbf16>
    %20 = vector.extract_strided_slice %6 {offsets = [0, 18], sizes = [32, 384], strides = [1, 1]} : vector<32x420xbf16> to vector<32x384xbf16>
    %21 = vector.extract_strided_slice %20 {offsets = [0, 0], sizes = [16, 384], strides = [1, 1]} : vector<32x384xbf16> to vector<16x384xbf16>
    %22 = vector.extract_strided_slice %20 {offsets = [16, 0], sizes = [16, 384], strides = [1, 1]} : vector<32x384xbf16> to vector<16x384xbf16>
    %23 = vector.extract_strided_slice %7 {offsets = [0, 18], sizes = [32, 384], strides = [1, 1]} : vector<32x420xbf16> to vector<32x384xbf16>
    %24 = vector.extract_strided_slice %23 {offsets = [0, 0], sizes = [16, 384], strides = [1, 1]} : vector<32x384xbf16> to vector<16x384xbf16>
    %25 = vector.extract_strided_slice %23 {offsets = [16, 0], sizes = [16, 384], strides = [1, 1]} : vector<32x384xbf16> to vector<16x384xbf16>
    %26 = vector.extract_strided_slice %5 {offsets = [0, 36], sizes = [32, 384], strides = [1, 1]} : vector<32x420xbf16> to vector<32x384xbf16>
    %27 = vector.extract_strided_slice %26 {offsets = [0, 0], sizes = [16, 384], strides = [1, 1]} : vector<32x384xbf16> to vector<16x384xbf16>
    %28 = vector.extract_strided_slice %26 {offsets = [16, 0], sizes = [16, 384], strides = [1, 1]} : vector<32x384xbf16> to vector<16x384xbf16>
    %29 = vector.extract_strided_slice %6 {offsets = [0, 36], sizes = [32, 384], strides = [1, 1]} : vector<32x420xbf16> to vector<32x384xbf16>
    %30 = vector.extract_strided_slice %29 {offsets = [0, 0], sizes = [16, 384], strides = [1, 1]} : vector<32x384xbf16> to vector<16x384xbf16>
    %31 = vector.extract_strided_slice %29 {offsets = [16, 0], sizes = [16, 384], strides = [1, 1]} : vector<32x384xbf16> to vector<16x384xbf16>
    %32 = vector.extract_strided_slice %7 {offsets = [0, 36], sizes = [32, 384], strides = [1, 1]} : vector<32x420xbf16> to vector<32x384xbf16>
    %33 = vector.extract_strided_slice %32 {offsets = [0, 0], sizes = [16, 384], strides = [1, 1]} : vector<32x384xbf16> to vector<16x384xbf16>
    %34 = vector.extract_strided_slice %32 {offsets = [16, 0], sizes = [16, 384], strides = [1, 1]} : vector<32x384xbf16> to vector<16x384xbf16>
    %cst = arith.constant 1.000000e+00 : bf16
    %35 = vector.broadcast %cst : bf16 to vector<1x384xbf16>
    %36 = tpu.concatenate %9, %12, %15, %18, %21, %24, %27, %30, %33, %35 in 0 : vector<16x384xbf16>, vector<16x384xbf16>, vector<16x384xbf16>, vector<16x384xbf16>, vector<16x384xbf16>, vector<16x384xbf16>, vector<16x384xbf16>, vector<16x384xbf16>, vector<16x384xbf16>, vector<1x384xbf16> -> vector<145x384xbf16>
    %c0_5 = arith.constant 0 : index
    %c0_6 = arith.constant 0 : index
    %37 = vector.load %arg4[%c0_5, %c0_6] : memref<145x145xbf16, #tpu.memory_space<vmem>>, vector<145x145xbf16>
    %cst_7 = arith.constant dense<0.000000e+00> : vector<145x384xf32>
    %38 = tpu.matmul %37, %36, %cst_7 {dimension_numbers = #tpu.dot_dimension_numbers<[1], [0], [0], [1], [0, 0, 1, 1], [], []>} : vector<145x145xbf16>, vector<145x384xbf16>, vector<145x384xf32> -> vector<145x384xf32>
    %39 = vector.extract_strided_slice %38 {offsets = [144, 0], sizes = [1, 384], strides = [1, 1]} : vector<145x384xf32> to vector<1x384xf32>
    %40 = vector.extract_strided_slice %38 {offsets = [0, 0], sizes = [16, 384], strides = [1, 1]} : vector<145x384xf32> to vector<16x384xf32>
    %41 = arith.extf %10 : vector<16x384xbf16> to vector<16x384xf32>
    %42 = arith.mulf %40, %41 : vector<16x384xf32>
    %cst_8 = arith.constant dense<0.000000e+00> : vector<384xf32>
    %43 = vector.multi_reduction <add>, %42, %cst_8 [0] : vector<16x384xf32> to vector<384xf32>
    %44 = vector.shape_cast %43 : vector<384xf32> to vector<1x384xf32>
    %45 = arith.addf %39, %44 : vector<1x384xf32>
    %46 = vector.extract_strided_slice %38 {offsets = [16, 0], sizes = [16, 384], strides = [1, 1]} : vector<145x384xf32> to vector<16x384xf32>
    %47 = arith.extf %13 : vector<16x384xbf16> to vector<16x384xf32>
    %48 = arith.mulf %46, %47 : vector<16x384xf32>
    %cst_9 = arith.constant dense<0.000000e+00> : vector<384xf32>
    %49 = vector.multi_reduction <add>, %48, %cst_9 [0] : vector<16x384xf32> to vector<384xf32>
    %50 = vector.shape_cast %49 : vector<384xf32> to vector<1x384xf32>
    %51 = arith.addf %45, %50 : vector<1x384xf32>
    %52 = vector.extract_strided_slice %38 {offsets = [32, 0], sizes = [16, 384], strides = [1, 1]} : vector<145x384xf32> to vector<16x384xf32>
    %53 = arith.extf %16 : vector<16x384xbf16> to vector<16x384xf32>
    %54 = arith.mulf %52, %53 : vector<16x384xf32>
    %cst_10 = arith.constant dense<0.000000e+00> : vector<384xf32>
    %55 = vector.multi_reduction <add>, %54, %cst_10 [0] : vector<16x384xf32> to vector<384xf32>
    %56 = vector.shape_cast %55 : vector<384xf32> to vector<1x384xf32>
    %57 = arith.addf %51, %56 : vector<1x384xf32>
    %58 = vector.extract_strided_slice %38 {offsets = [48, 0], sizes = [16, 384], strides = [1, 1]} : vector<145x384xf32> to vector<16x384xf32>
    %59 = arith.extf %19 : vector<16x384xbf16> to vector<16x384xf32>
    %60 = arith.mulf %58, %59 : vector<16x384xf32>
    %cst_11 = arith.constant dense<0.000000e+00> : vector<384xf32>
    %61 = vector.multi_reduction <add>, %60, %cst_11 [0] : vector<16x384xf32> to vector<384xf32>
    %62 = vector.shape_cast %61 : vector<384xf32> to vector<1x384xf32>
    %63 = arith.addf %57, %62 : vector<1x384xf32>
    %64 = vector.extract_strided_slice %38 {offsets = [64, 0], sizes = [16, 384], strides = [1, 1]} : vector<145x384xf32> to vector<16x384xf32>
    %65 = arith.extf %22 : vector<16x384xbf16> to vector<16x384xf32>
    %66 = arith.mulf %64, %65 : vector<16x384xf32>
    %cst_12 = arith.constant dense<0.000000e+00> : vector<384xf32>
    %67 = vector.multi_reduction <add>, %66, %cst_12 [0] : vector<16x384xf32> to vector<384xf32>
    %68 = vector.shape_cast %67 : vector<384xf32> to vector<1x384xf32>
    %69 = arith.addf %63, %68 : vector<1x384xf32>
    %70 = vector.extract_strided_slice %38 {offsets = [80, 0], sizes = [16, 384], strides = [1, 1]} : vector<145x384xf32> to vector<16x384xf32>
    %71 = arith.extf %25 : vector<16x384xbf16> to vector<16x384xf32>
    %72 = arith.mulf %70, %71 : vector<16x384xf32>
    %cst_13 = arith.constant dense<0.000000e+00> : vector<384xf32>
    %73 = vector.multi_reduction <add>, %72, %cst_13 [0] : vector<16x384xf32> to vector<384xf32>
    %74 = vector.shape_cast %73 : vector<384xf32> to vector<1x384xf32>
    %75 = arith.addf %69, %74 : vector<1x384xf32>
    %76 = vector.extract_strided_slice %38 {offsets = [96, 0], sizes = [16, 384], strides = [1, 1]} : vector<145x384xf32> to vector<16x384xf32>
    %77 = arith.extf %28 : vector<16x384xbf16> to vector<16x384xf32>
    %78 = arith.mulf %76, %77 : vector<16x384xf32>
    %cst_14 = arith.constant dense<0.000000e+00> : vector<384xf32>
    %79 = vector.multi_reduction <add>, %78, %cst_14 [0] : vector<16x384xf32> to vector<384xf32>
    %80 = vector.shape_cast %79 : vector<384xf32> to vector<1x384xf32>
    %81 = arith.addf %75, %80 : vector<1x384xf32>
    %82 = vector.extract_strided_slice %38 {offsets = [112, 0], sizes = [16, 384], strides = [1, 1]} : vector<145x384xf32> to vector<16x384xf32>
    %83 = arith.extf %31 : vector<16x384xbf16> to vector<16x384xf32>
    %84 = arith.mulf %82, %83 : vector<16x384xf32>
    %cst_15 = arith.constant dense<0.000000e+00> : vector<384xf32>
    %85 = vector.multi_reduction <add>, %84, %cst_15 [0] : vector<16x384xf32> to vector<384xf32>
    %86 = vector.shape_cast %85 : vector<384xf32> to vector<1x384xf32>
    %87 = arith.addf %81, %86 : vector<1x384xf32>
    %88 = vector.extract_strided_slice %38 {offsets = [128, 0], sizes = [16, 384], strides = [1, 1]} : vector<145x384xf32> to vector<16x384xf32>
    %89 = arith.extf %34 : vector<16x384xbf16> to vector<16x384xf32>
    %90 = arith.mulf %88, %89 : vector<16x384xf32>
    %cst_16 = arith.constant dense<0.000000e+00> : vector<384xf32>
    %91 = vector.multi_reduction <add>, %90, %cst_16 [0] : vector<16x384xf32> to vector<384xf32>
    %92 = vector.shape_cast %91 : vector<384xf32> to vector<1x384xf32>
    %93 = arith.addf %87, %92 : vector<1x384xf32>
    %94 = arith.negf %93 : vector<1x384xf32>
    %95 = math.exp %94 : vector<1x384xf32>
    %cst_17 = arith.constant 1.000000e+00 : f32
    %96 = vector.broadcast %cst_17 : f32 to vector<1x384xf32>
    %97 = arith.addf %96, %95 : vector<1x384xf32>
    %98 = arith.divf %96, %97 : vector<1x384xf32>
    %c0_18 = arith.constant 0 : index
    %c0_19 = arith.constant 0 : index
    %c0_20 = arith.constant 0 : index
    %99 = vector.load %arg5[%c0_18, %c0_19, %c0_20] : memref<1x1x384xf32, #tpu.memory_space<vmem>>, vector<1x1x384xf32>
    %100 = vector.shape_cast %99 : vector<1x1x384xf32> to vector<1x384xf32>
    %101 = vector.shape_cast %98 : vector<1x384xf32> to vector<1x1x384xf32>
    tpu.vector_store %arg5[%c0_18, %c0_19, %c0_20], %101 {strides = array<i32>} : memref<1x1x384xf32, #tpu.memory_space<vmem>>, vector<1x1x384xf32>,
    return
  }
  func.func @transform_0(%arg0: i32, %arg1: i32) -> (i32, i32, i32) {
    %c0_i32 = arith.constant 0 : i32
    %c0_i32_0 = arith.constant 0 : i32
    return %arg0, %c0_i32, %arg1 : i32, i32, i32
  }
  func.func @transform_1(%arg0: i32, %arg1: i32) -> (i32, i32, i32) {
    %c1_i32 = arith.constant 1 : i32
    %0 = arith.addi %arg1, %c1_i32 : i32
    %c3_i32 = arith.constant 3 : i32
    %1 = arith.muli %0, %c3_i32 : i32
    %c0_i32 = arith.constant 0 : i32
    %c0_i32_0 = arith.constant 0 : i32
    return %arg0, %c0_i32, %1 : i32, i32, i32
  }
  func.func @transform_2(%arg0: i32, %arg1: i32) -> (i32, i32) {
    %c0_i32 = arith.constant 0 : i32
    %c0_i32_0 = arith.constant 0 : i32
    %c0_i32_1 = arith.constant 0 : i32
    return %c0_i32, %c0_i32_0 : i32, i32
  }
  func.func @transform_3(%arg0: i32, %arg1: i32) -> (i32, i32, i32) {
    %c0_i32 = arith.constant 0 : i32
    %c0_i32_0 = arith.constant 0 : i32
    return %arg0, %c0_i32, %arg1 : i32, i32, i32
  }
}

</mosaic_0001>

<llo_original>
// kernel: squeeze.1
$region0: #{squeeze.1}
  %s0 = inlined_call_operand.vmem [shape: f32[2,288], index: 0, kind: input, shape index: {}]
  %s1 = inlined_call_operand.vmem [shape: f32[2,16,18], index: 1, kind: output, shape index: {}]
  $region1: #{squeeze.1} parent=0
    #allocation0 [shape = 'u8[12288]{0}', space=vmem, size = 0x3000, scoped, tag = 'scoped mem for input reshape']
    %s3 = ssub.s32 4, 1
    %s4 = scalar_lea.vmem %s0, 4
    %v5 = vld [vmem:[%s4] sm:%s3]
    %s6 = scalar_lea.vmem [#allocation0], 16
    %7 = vst [vmem:[%s6] sm:%s3] %v5
    %s8 = scalar_lea.vmem %s0, 2
    %v9 = vld [vmem:[%s8] sm:%s3]
    %s10 = scalar_lea.vmem [#allocation0], 8
    %11 = vst [vmem:[%s10] sm:%s3] %v9
    %v12 = vld [vmem:[%s0] sm:%s3]
    %13 = vst [vmem:[#allocation0] sm:%s3] %v12
    %v14 = vld [vmem:[#allocation0] sm:$0x3]
    %vm15 = vcmask 146432
    %16 = vst.msk [vmem:[%s1] ss:$16 sm:$0x3] %vm15, %v14
    %s17 = scalar_lea.vmem [#allocation0], 16
    %v18 = vld [vmem:[%s17] sm:$0x3]
    %19 = vrot.lane.b32.xlu0 %v18, 114
    %v20 = vpop.permute.xlu0 %19
    %vm21 = vcmask 146432
    %s22 = scalar_lea.vmem %s1, 15
    %23 = vst.msk [vmem:[%s22] ss:$16 sm:$0x3] %vm21, %v20
    %s24 = scalar_lea.vmem [#allocation0], 8
    %v25 = vld [vmem:[%s24] sm:$0x3]
    %26 = vrot.lane.b32.xlu0 %v25, 112
    %v27 = vpop.permute.xlu0 %26
    %vm28 = vcmask 146432
    %s29 = scalar_lea.vmem %s1, 8
    %30 = vst.msk [vmem:[%s29] ss:$16 sm:$0x3] %vm28, %v27
    %v31 = vld [vmem:[#allocation0] sm:$0x3]
    %32 = vrot.lane.b32.xlu0 %v31, 110
    %v33 = vpop.permute.xlu0 %32
    %vm34 = vcmask 146432
    %s35 = scalar_lea.vmem %s1, 1
    %36 = vst.msk [vmem:[%s35] ss:$16 sm:$0x3] %vm34, %v33
    %s37 = scalar_lea.vmem [#allocation0], 8
    %v38 = vld [vmem:[%s37] sm:$0x3]
    %39 = vrot.lane.b32.xlu0 %v38, 94
    %v40 = vpop.permute.xlu0 %39
    %vm41 = vcmask 146432
    %s42 = scalar_lea.vmem %s1, 9
    %43 = vst.msk [vmem:[%s42] ss:$16 sm:$0x3] %vm41, %v40
    %v44 = vld [vmem:[#allocation0] sm:$0x3]
    %45 = vrot.lane.b32.xlu0 %v44, 92
    %v46 = vpop.permute.xlu0 %45
    %vm47 = vcmask 146432
    %s48 = scalar_lea.vmem %s1, 2
    %49 = vst.msk [vmem:[%s48] ss:$16 sm:$0x3] %vm47, %v46
    %s50 = scalar_lea.vmem [#allocation0], 8
    %v51 = vld [vmem:[%s50] sm:$0x3]
    %52 = vrot.lane.b32.xlu0 %v51, 76
    %v53 = vpop.permute.xlu0 %52
    %vm54 = vcmask 146432
    %s55 = scalar_lea.vmem %s1, 10
    %56 = vst.msk [vmem:[%s55] ss:$16 sm:$0x3] %vm54, %v53
    %v57 = vld [vmem:[#allocation0] sm:$0x3]
    %58 = vrot.lane.b32.xlu0 %v57, 74
    %v59 = vpop.permute.xlu0 %58
    %vm60 = vcmask 146432
    %s61 = scalar_lea.vmem %s1, 3
    %62 = vst.msk [vmem:[%s61] ss:$16 sm:$0x3] %vm60, %v59
    %s63 = scalar_lea.vmem [#allocation0], 8
    %v64 = vld [vmem:[%s63] sm:$0x3]
    %65 = vrot.lane.b32.xlu0 %v64, 58
    %v66 = vpop.permute.xlu0 %65
    %vm67 = vcmask 146432
    %s68 = scalar_lea.vmem %s1, 11
    %69 = vst.msk [vmem:[%s68] ss:$16 sm:$0x3] %vm67, %v66
    %v70 = vld [vmem:[#allocation0] sm:$0x3]
    %71 = vrot.lane.b32.xlu0 %v70, 56
    %v72 = vpop.permute.xlu0 %71
    %vm73 = vcmask 146432
    %s74 = scalar_lea.vmem %s1, 4
    %75 = vst.msk [vmem:[%s74] ss:$16 sm:$0x3] %vm73, %v72
    %s76 = scalar_lea.vmem [#allocation0], 8
    %v77 = vld [vmem:[%s76] sm:$0x3]
    %78 = vrot.lane.b32.xlu0 %v77, 40
    %v79 = vpop.permute.xlu0 %78
    %vm80 = vcmask 146432
    %s81 = scalar_lea.vmem %s1, 12
    %82 = vst.msk [vmem:[%s81] ss:$16 sm:$0x3] %vm80, %v79
    %v83 = vld [vmem:[#allocation0] sm:$0x3]
    %84 = vrot.lane.b32.xlu0 %v83, 38
    %v85 = vpop.permute.xlu0 %84
    %vm86 = vcmask 146432
    %s87 = scalar_lea.vmem %s1, 5
    %88 = vst.msk [vmem:[%s87] ss:$16 sm:$0x3] %vm86, %v85
    %s89 = scalar_lea.vmem [#allocation0], 8
    %v90 = vld [vmem:[%s89] sm:$0x3]
    %91 = vrot.lane.b32.xlu0 %v90, 22
    %v92 = vpop.permute.xlu0 %91
    %vm93 = vcmask 146432
    %s94 = scalar_lea.vmem %s1, 13
    %95 = vst.msk [vmem:[%s94] ss:$16 sm:$0x3] %vm93, %v92
    %v96 = vld [vmem:[#allocation0] sm:$0x3]
    %97 = vrot.lane.b32.xlu0 %v96, 20
    %v98 = vpop.permute.xlu0 %97
    %vm99 = vcmask 146432
    %s100 = scalar_lea.vmem %s1, 6
    %101 = vst.msk [vmem:[%s100] ss:$16 sm:$0x3] %vm99, %v98
    %s102 = scalar_lea.vmem [#allocation0], 8
    %v103 = vld [vmem:[%s102] sm:$0x3]
    %s104 = scalar_lea.vmem [#allocation0], 16
    %v105 = vld [vmem:[%s104] sm:$0x3]
    %vm106 = vcmask 1014784
    %v107 = vsel %vm106, %v105, %v103
    %108 = vrot.lane.b32.xlu0 %v107, 4
    %v109 = vpop.permute.xlu0 %108
    %vm110 = vcmask 31744
    %s111 = scalar_lea.vmem %s1, 14
    %112 = vst.msk [vmem:[%s111] ss:$16 sm:$0x3] %vm110, %v109
    %vm113 = vcmask 146464
    %s114 = scalar_lea.vmem %s1, 14
    %115 = vst.msk [vmem:[%s114] ss:$16 sm:$0x3] %vm113, %v109
    %v116 = vld [vmem:[#allocation0] sm:$0x3]
    %s117 = scalar_lea.vmem [#allocation0], 8
    %v118 = vld [vmem:[%s117] sm:$0x3]
    %vm119 = vcmask 1031168
    %v120 = vsel %vm119, %v118, %v116
    %121 = vrot.lane.b32.xlu0 %v120, 2
    %v122 = vpop.permute.xlu0 %121
    %vm123 = vcmask 15360
    %s124 = scalar_lea.vmem %s1, 7
    %125 = vst.msk [vmem:[%s124] ss:$16 sm:$0x3] %vm123, %v122
    %vm126 = vcmask 146448
    %s127 = scalar_lea.vmem %s1, 7
    %128 = vst.msk [vmem:[%s127] ss:$16 sm:$0x3] %vm126, %v122

// kernel: temporal_stabilization.1
$region0: #{temporal_stabilization.1}
  #allocation0 [shape = 'u32[]', space=smem, size = 0x4, offset = 0x4, fixed_abs, tag = 'smem constant byte address 0x4 - core index']
  #allocation1 [shape = 'u32[72,128]{1,0:T(1,128)}', space=vmem, size = 0x9000, scoped, tag = 'internal scratch']
  %s0 = inlined_call_operand.vmem [shape: bf16[2,32,522], index: 0, kind: input, shape index: {}, may-alias: {0,1}]
  %s1 = inlined_call_operand.vmem [shape: bf16[2,32,522], index: 1, kind: input, shape index: {}, may-alias: {0,1}]
  %s2 = inlined_call_operand.vmem [shape: bf16[145,145], index: 2, kind: input, shape index: {}]
  %s3 = inlined_call_operand.vmem [shape: f32[2,1,384], index: 3, kind: output, shape index: {}]
  %s4 = sld [smem:[#allocation0]]
  $region152: #{temporal_stabilization.1} parent=0
    _
  %s6 = ssub.s32 1, %s4
  %s7 = scalar_select 0, %s6, %s4
  $region1: #{temporal_stabilization.1} parent=0
    #allocation2 [shape = 'u8[49152]{0}', space=vmem, size = 0xc000, scoped, tag = 'input window, operand 0']
    #allocation3 [shape = 'u8[16384]{0}', space=vmem, size = 0x4000, scoped, tag = 'input window, operand 1']
    loop: start=0, step=1, limit=4
    $region2: #{temporal_stabilization.1} parent=1 // loop_pre_header
      _
    $region3: #{temporal_stabilization.1} parent=1 // loop_header
      %s9 = sphi 0, %s13
      %p10 = scmp.ge.s32.totalorder %s9, 4
      %s16 = sphi 0, %s28
      %s17 = sphi 0, %s24
      %s18 = sphi 0, %s16
      %s19 = sphi 0, %s17
      %s20 = sphi 0, %s18
      %s21 = sphi 0, %s19
      %s33 = sphi 0, %s35
      %s36 = sphi 0, %s33
      %s37 = sphi 0, %s36
      %s53 = sphi 0, %s37
      %s65 = sphi 0, %s67
      %s68 = sphi 0, %s65
      %s69 = sphi 0, %s68
      %s85 = sphi 0, %s69
      %s89 = sphi 0, %s89
      %s91 = sphi 0, %s89
      %s92 = sphi 0, %s91
      %s106 = sphi 0, %s92
      %s114 = sphi 0, %s116
      %s117 = sphi 0, %s114
      %s118 = sphi 0, %s117
      %s134 = sphi 0, %s118
    $region4: #{temporal_stabilization.1} parent=1 // loop_header_branch
      %12 = sbr.rel (%p10) target = $region8
    $region5: #{temporal_stabilization.1} parent=1 // loop_body
      %s14 = ssub.s32 %s9, 1
      %s15 = ssub.s32 %s9, 2
      %s22 = sadd.s32 1, %s17
      %p23 = scmp.ge.s32.totalorder %s22, 1
      %s24 = scalar_select %p23, 0, %s22
      %s25 = sadd.s32 1, %s16
      %s26 = scalar_select %p23, %s25, %s16
      %p27 = scmp.ge.s32.totalorder %s26, 2
      %s28 = scalar_select %p27, 0, %s26
      %s29 = ssub.s32 %s16, %s28
      %s30 = ssub.s32 %s17, %s24
      %s31 = sor.u32 %s29, %s30
      %p32 = scmp.eq.s32.totalorder %s31, 0
      %s34 = sadd.s32 %s33, 1
      %s35 = scalar_select %p32, %s33, %s34
      %p38 = pneg %p32
      %p39 = scmp.eq.s32.totalorder %s9, 1
      %p40 = por %p38, %p39
      %p41 = scmp.ne.s32.totalorder %s33, %s36
      %p42 = scmp.eq.s32.totalorder %s9, 0
      %p43 = por %p41, %p42
      %p44 = scmp.ne.s32.totalorder %s33, %s36
      %p45 = scmp.eq.s32.totalorder %s14, 1
      %p46 = por %p44, %p45
      %p47 = scmp.ne.s32.totalorder %s36, %s37
      %p48 = scmp.eq.s32.totalorder %s14, 0
      %p49 = por %p47, %p48
      %p50 = scmp.ne.s32.totalorder %s36, %s37
      %p51 = scmp.eq.s32.totalorder %s15, 1
      %p52 = por %p50, %p51
      %p54 = scmp.ne.s32.totalorder %s37, %s53
      %p55 = scmp.eq.s32.totalorder %s15, 0
      %p56 = por %p54, %p55
      %s57 = sadd.s32 %s17, 1
      %s58 = smul.u32 %s57, 3
      %s59 = sadd.s32 %s24, 1
      %s60 = smul.u32 %s59, 3
      %s61 = ssub.s32 %s16, %s28
      %s62 = ssub.s32 %s58, %s60
      %s63 = sor.u32 %s61, %s62
      %p64 = scmp.eq.s32.totalorder %s63, 0
      %s66 = sadd.s32 %s65, 1
      %s67 = scalar_select %p64, %s65, %s66
      %p70 = pneg %p64
      %p71 = scmp.eq.s32.totalorder %s9, 1
      %p72 = por %p70, %p71
      %p73 = scmp.ne.s32.totalorder %s65, %s68
      %p74 = scmp.eq.s32.totalorder %s9, 0
      %p75 = por %p73, %p74
      %p76 = scmp.ne.s32.totalorder %s65, %s68
      %p77 = scmp.eq.s32.totalorder %s14, 1
      %p78 = por %p76, %p77
      %p79 = scmp.ne.s32.totalorder %s68, %s69
      %p80 = scmp.eq.s32.totalorder %s14, 0
      %p81 = por %p79, %p80
      %p82 = scmp.ne.s32.totalorder %s68, %s69
      %p83 = scmp.eq.s32.totalorder %s15, 1
      %p84 = por %p82, %p83
      %p86 = scmp.ne.s32.totalorder %s69, %s85
      %p87 = scmp.eq.s32.totalorder %s15, 0
      %p88 = por %p86, %p87
      %s90 = sadd.s32 %s89, 1
      %p93 = scmp.eq.s32.totalorder %s9, 1
      %p94 = scmp.ne.s32.totalorder %s89, %s91
      %p95 = scmp.eq.s32.totalorder %s9, 0
      %p96 = por %p94, %p95
      %p97 = scmp.ne.s32.totalorder %s89, %s91
      %p98 = scmp.eq.s32.totalorder %s14, 1
      %p99 = por %p97, %p98
      %p100 = scmp.ne.s32.totalorder %s91, %s92
      %p101 = scmp.eq.s32.totalorder %s14, 0
      %p102 = por %p100, %p101
      %p103 = scmp.ne.s32.totalorder %s91, %s92
      %p104 = scmp.eq.s32.totalorder %s15, 1
      %p105 = por %p103, %p104
      %p107 = scmp.ne.s32.totalorder %s92, %s106
      %p108 = scmp.eq.s32.totalorder %s15, 0
      %p109 = por %p107, %p108
      %s110 = ssub.s32 %s16, %s28
      %s111 = ssub.s32 %s17, %s24
      %s112 = sor.u32 %s110, %s111
      %p113 = scmp.eq.s32.totalorder %s112, 0
      %s115 = sadd.s32 %s114, 1
      %s116 = scalar_select %p113, %s114, %s115
      %p119 = pneg %p113
      %p120 = scmp.eq.s32.totalorder %s9, 1
      %p121 = por %p119, %p120
      %p122 = scmp.ne.s32.totalorder %s114, %s117
      %p123 = scmp.eq.s32.totalorder %s9, 0
      %p124 = por %p122, %p123
      %p125 = scmp.ne.s32.totalorder %s114, %s117
      %p126 = scmp.eq.s32.totalorder %s14, 1
      %p127 = por %p125, %p126
      %p128 = scmp.ne.s32.totalorder %s117, %s118
      %p129 = scmp.eq.s32.totalorder %s14, 0
      %p130 = por %p128, %p129
      %p131 = scmp.ne.s32.totalorder %s117, %s118
      %p132 = scmp.eq.s32.totalorder %s15, 1
      %p133 = por %p131, %p132
      %p135 = scmp.ne.s32.totalorder %s118, %s134
      %p136 = scmp.eq.s32.totalorder %s15, 0
      %p137 = por %p135, %p136
      %p138 = scmp.le.s32.totalorder 1, %s9
      %p139 = scmp.lt.s32.totalorder %s9, 3
      %p140 = pnand %p138, %p139
      %p141 = pneg %p140
      // Predicated region
      $region9: #{temporal_stabilization.1} parent=5 // pred_check
        _
      $region10: #{temporal_stabilization.1} parent=5 // pred_check_branch
        %143 = sbr.rel (%p140) target = $region12
      $region11: #{temporal_stabilization.1} parent=5 // pred_region
        %s144 = ssub.s32 %s9, 1
        // Predicated region
        $region13: #{temporal_stabilization.1} parent=11 // pred_check
          %p145 = pneg %p102
        $region14: #{temporal_stabilization.1} parent=11 // pred_check_branch
          %147 = sbr.rel (%p145) target = $region16
        $region15: #{temporal_stabilization.1} parent=11 // pred_region
          _
        $region16: #{temporal_stabilization.1} parent=11 // pred_fallthru
          _
      $region12: #{temporal_stabilization.1} parent=5 // pred_fallthru
        _
      %p148 = scmp.lt.s32.totalorder %s9, 2
      // Predicated region
      $region17: #{temporal_stabilization.1} parent=5 // pred_check
        %p149 = pneg %p148
      $region18: #{temporal_stabilization.1} parent=5 // pred_check_branch
        %151 = sbr.rel (%p149) target = $region20
      $region19: #{temporal_stabilization.1} parent=5 // pred_region
        // Predicated region
        $region21: #{temporal_stabilization.1} parent=19 // pred_check
          %p152 = pneg %p43
        $region22: #{temporal_stabilization.1} parent=19 // pred_check_branch
          %154 = sbr.rel (%p152) target = $region24
        $region23: #{temporal_stabilization.1} parent=19 // pred_region
          %s155 = sand.u32 %s33, 1
          %s156 = sand.u32 %s33, 1
          %s157 = smul.addr %s156, 48
          %s158 = scalar_lea.vmem [#allocation2], %s157
          %s159 = smul.u32 3, %s17
          %s160 = ssub.s32 5, %s159
          %p161 = scmp.lt.s32.totalorder %s160, 3
          %s162 = scalar_select %p161, %s160, 3
          %s163 = smul.u32 16, %s162
          %p164 = scmp.ne.s32.totalorder 0, %s163
          %s165 = smul.addr %s16, 20
          %s166 = sadd.s32 %s159, %s165
          %s167 = smul.addr %s166, 4
          %s168 = scalar_lea.vmem %s0, %s167
          %s169 = smul.u32 %s162, 4
          // Predicated region
          $region25: #{temporal_stabilization.1} parent=23 // pred_check
            %p170 = pneg %p164
          $region26: #{temporal_stabilization.1} parent=23 // pred_check_branch
            %172 = sbr.rel (%p170) target = $region28
          $region27: #{temporal_stabilization.1} parent=23 // pred_region
            %p173 = scmp.lt.u32.totalorder %s169, 8
            %p174 = pneg %p173
            // Predicated region
            $region29: #{temporal_stabilization.1} parent=27 // pred_check
              _
            $region30: #{temporal_stabilization.1} parent=27 // pred_check_branch
              %176 = sbr.rel (%p173) target = $region32
            $region31: #{temporal_stabilization.1} parent=27 // pred_region
              %s198 = sand.u32 %s169, 7
              %p199 = scmp.eq.s32.totalorder %s198, 0
              // Predicated region
              $region44: #{temporal_stabilization.1} parent=31 // pred_check
                %p200 = pneg %p199
              $region45: #{temporal_stabilization.1} parent=31 // pred_check_branch
                %202 = sbr.rel (%p200) target = $region47
              $region46: #{temporal_stabilization.1} parent=31 // pred_region
                %s203 = sshrl.u32 %s169, 3
                %s204 = sshrl.u32 %s203, 3
                // While loop
                $region48: #{temporal_stabilization.1} parent=46 // loop_pre_header
                  _
                $region49: #{temporal_stabilization.1} parent=46 // loop_header
                  %s206 = sphi 0, %s208
                  %p207 = scmp.ge.s32.totalorder %s206, %s204
                  %s211 = sphi 0, %s280
                  %s212 = sphi %s168, %s283
                  %s213 = sphi %s158, %s284
                $region50: #{temporal_stabilization.1} parent=46 // loop_header_branch
                  %210 = sbr.rel (%p207) target = $region54
                $region51: #{temporal_stabilization.1} parent=46 // loop_body
                  %v214 = vld [vmem:[%s212] sm:$0xff]
                  %215 = vst [vmem:[%s213] sm:$0xff] %v214
                  %v216 = vld [vmem:[%s212 + $0x8] sm:$0xff]
                  %217 = vst [vmem:[%s213 + $0x8] sm:$0xff] %v216
                  %v218 = vld [vmem:[%s212 + $0x10] sm:$0xff]
                  %219 = vst [vmem:[%s213 + $0x10] sm:$0xff] %v218
                  %v220 = vld [vmem:[%s212 + $0x18] sm:$0xff]
                  %221 = vst [vmem:[%s213 + $0x18] sm:$0xff] %v220
                  %v222 = vld [vmem:[%s212 + $0x20] sm:$0xff]
                  %223 = vst [vmem:[%s213 + $0x20] sm:$0xff] %v222
                  %v224 = vld [vmem:[%s212 + $0x28] sm:$0xff]
                  %225 = vst [vmem:[%s213 + $0x28] sm:$0xff] %v224
                  %v226 = vld [vmem:[%s212 + $0x30] sm:$0xff]
                  %227 = vst [vmem:[%s213 + $0x30] sm:$0xff] %v226
                  %v228 = vld [vmem:[%s212 + $0x38] sm:$0xff]
                  %229 = vst [vmem:[%s213 + $0x38] sm:$0xff] %v228
                  %v230 = vld [vmem:[%s212 + $0x14] sm:$0xff]
                  %231 = vst [vmem:[%s213 + $0xc] sm:$0xff] %v230
                  %v232 = vld [vmem:[%s212 + $0x1c] sm:$0xff]
                  %233 = vst [vmem:[%s213 + $0x14] sm:$0xff] %v232
                  %v234 = vld [vmem:[%s212 + $0x24] sm:$0xff]
                  %235 = vst [vmem:[%s213 + $0x1c] sm:$0xff] %v234
                  %v236 = vld [vmem:[%s212 + $0x2c] sm:$0xff]
                  %237 = vst [vmem:[%s213 + $0x24] sm:$0xff] %v236
                  %v238 = vld [vmem:[%s212 + $0x34] sm:$0xff]
                  %239 = vst [vmem:[%s213 + $0x2c] sm:$0xff] %v238
                  %v240 = vld [vmem:[%s212 + $0x3c] sm:$0xff]
                  %241 = vst [vmem:[%s213 + $0x34] sm:$0xff] %v240
                  %v242 = vld [vmem:[%s212 + $0x44] sm:$0xff]
                  %243 = vst [vmem:[%s213 + $0x3c] sm:$0xff] %v242
                  %v244 = vld [vmem:[%s212 + $0x4c] sm:$0xff]
                  %245 = vst [vmem:[%s213 + $0x44] sm:$0xff] %v244
                  %v246 = vld [vmem:[%s212 + $0x28] sm:$0xff]
                  %247 = vst [vmem:[%s213 + $0x18] sm:$0xff] %v246
                  %v248 = vld [vmem:[%s212 + $0x30] sm:$0xff]
                  %249 = vst [vmem:[%s213 + $0x20] sm:$0xff] %v248
                  %v250 = vld [vmem:[%s212 + $0x38] sm:$0xff]
                  %251 = vst [vmem:[%s213 + $0x28] sm:$0xff] %v250
                  %v252 = vld [vmem:[%s212 + $0x40] sm:$0xff]
                  %253 = vst [vmem:[%s213 + $0x30] sm:$0xff] %v252
                  %v254 = vld [vmem:[%s212 + $0x48] sm:$0xff]
                  %255 = vst [vmem:[%s213 + $0x38] sm:$0xff] %v254
                  %v256 = vld [vmem:[%s212 + $0x50] sm:$0xff]
                  %257 = vst [vmem:[%s213 + $0x40] sm:$0xff] %v256
                  %v258 = vld [vmem:[%s212 + $0x58] sm:$0xff]
                  %259 = vst [vmem:[%s213 + $0x48] sm:$0xff] %v258
                  %v260 = vld [vmem:[%s212 + $0x60] sm:$0xff]
                  %261 = vst [vmem:[%s213 + $0x50] sm:$0xff] %v260
                  %v262 = vld [vmem:[%s212 + $0x3c] sm:$0xff]
                  %263 = vst [vmem:[%s213 + $0x24] sm:$0xff] %v262
                  %v264 = vld [vmem:[%s212 + $0x44] sm:$0xff]
                  %265 = vst [vmem:[%s213 + $0x2c] sm:$0xff] %v264
                  %v266 = vld [vmem:[%s212 + $0x4c] sm:$0xff]
                  %267 = vst [vmem:[%s213 + $0x34] sm:$0xff] %v266
                  %v268 = vld [vmem:[%s212 + $0x54] sm:$0xff]
                  %269 = vst [vmem:[%s213 + $0x3c] sm:$0xff] %v268
                  %v270 = vld [vmem:[%s212 + $0x5c] sm:$0xff]
                  %271 = vst [vmem:[%s213 + $0x44] sm:$0xff] %v270
                  %v272 = vld [vmem:[%s212 + $0x64] sm:$0xff]
                  %273 = vst [vmem:[%s213 + $0x4c] sm:$0xff] %v272
                  %v274 = vld [vmem:[%s212 + $0x6c] sm:$0xff]
                  %275 = vst [vmem:[%s213 + $0x54] sm:$0xff] %v274
                  %v276 = vld [vmem:[%s212 + $0x74] sm:$0xff]
                  %277 = vst [vmem:[%s213 + $0x5c] sm:$0xff] %v276
                  %s278 = sadd.s32 1, %s211
                  %p279 = scmp.ge.s32.totalorder %s278, %s204
                  %s280 = scalar_select %p279, 0, %s278
                  %s281 = smul.u32 %s280, 64
                  %s282 = smul.u32 %s280, 64
                  %s283 = scalar_lea.vmem %s168, %s281
                  %s284 = scalar_lea.vmem %s158, %s282 [#allocation2]
                $region52: #{temporal_stabilization.1} parent=46 // loop_footer
                  %s208 = sadd.s32 %s206, 1
                $region53: #{temporal_stabilization.1} parent=46 // loop_footer_branch
                  %205 = sbr.rel target = $region49
                $region54: #{temporal_stabilization.1} parent=46 // loop_exit
                  _
                %s285 = sshrl.u32 %s203, 3
                %s286 = sand.u32 %s203, 7
                %s287 = smul.u32 %s285, 8
                %s288 = smul.u32 8, %s287
                %s289 = scalar_lea.vmem %s168, %s288
                %s290 = smul.u32 8, %s287
                %s291 = scalar_lea.vmem %s158, %s290 [#allocation2]
                // While loop
                $region55: #{temporal_stabilization.1} parent=46 // loop_pre_header
                  _
                $region56: #{temporal_stabilization.1} parent=46 // loop_header
                  %s293 = sphi 0, %s295
                  %p294 = scmp.ge.s32.totalorder %s293, %s286
                  %s298 = sphi 0, %s311
                  %s299 = sphi %s289, %s314
                  %s300 = sphi %s291, %s315
                $region57: #{temporal_stabilization.1} parent=46 // loop_header_branch
                  %297 = sbr.rel (%p294) target = $region61
                $region58: #{temporal_stabilization.1} parent=46 // loop_body
                  %v301 = vld [vmem:[%s299] sm:$0xff]
                  %302 = vst [vmem:[%s300] sm:$0xff] %v301
                  %v303 = vld [vmem:[%s299 + $0x14] sm:$0xff]
                  %304 = vst [vmem:[%s300 + $0xc] sm:$0xff] %v303
                  %v305 = vld [vmem:[%s299 + $0x28] sm:$0xff]
                  %306 = vst [vmem:[%s300 + $0x18] sm:$0xff] %v305
                  %v307 = vld [vmem:[%s299 + $0x3c] sm:$0xff]
                  %308 = vst [vmem:[%s300 + $0x24] sm:$0xff] %v307
                  %s309 = sadd.s32 1, %s298
                  %p310 = scmp.ge.s32.totalorder %s309, %s286
                  %s311 = scalar_select %p310, 0, %s309
                  %s312 = smul.u32 %s311, 8
                  %s313 = smul.u32 %s311, 8
                  %s314 = scalar_lea.vmem %s289, %s312
                  %s315 = scalar_lea.vmem %s291, %s313 [#allocation2]
                $region59: #{temporal_stabilization.1} parent=46 // loop_footer
                  %s295 = sadd.s32 %s293, 1
                $region60: #{temporal_stabilization.1} parent=46 // loop_footer_branch
                  %292 = sbr.rel target = $region56
                $region61: #{temporal_stabilization.1} parent=46 // loop_exit
                  _
              $region47: #{temporal_stabilization.1} parent=31 // pred_fallthru
                _
              %p316 = pneg %p199
              // Predicated region
              $region62: #{temporal_stabilization.1} parent=31 // pred_check
                _
              $region63: #{temporal_stabilization.1} parent=31 // pred_check_branch
                %318 = sbr.rel (%p199) target = $region65
              $region64: #{temporal_stabilization.1} parent=31 // pred_region
                %s319 = sand.u32 %s169, 7
                %s320 = ssub.s32 %s169, %s319
                %s321 = scalar_lea.vmem %s168, %s320
                %s322 = ssub.s32 %s169, %s319
                %s323 = scalar_lea.vmem %s158, %s322 [#allocation2]
                %s324 = sshrl.u32 %s169, 3
                %s325 = sshrl.u32 %s324, 3
                // While loop
                $region66: #{temporal_stabilization.1} parent=64 // loop_pre_header
                  _
                $region67: #{temporal_stabilization.1} parent=64 // loop_header
                  %s327 = sphi 0, %s329
                  %p328 = scmp.ge.s32.totalorder %s327, %s325
                  %s332 = sphi 0, %s401
                  %s333 = sphi %s168, %s404
                  %s334 = sphi %s158, %s405
                $region68: #{temporal_stabilization.1} parent=64 // loop_header_branch
                  %331 = sbr.rel (%p328) target = $region72
                $region69: #{temporal_stabilization.1} parent=64 // loop_body
                  %v335 = vld [vmem:[%s333] sm:$0xff]
                  %336 = vst [vmem:[%s334] sm:$0xff] %v335
                  %v337 = vld [vmem:[%s333 + $0x8] sm:$0xff]
                  %338 = vst [vmem:[%s334 + $0x8] sm:$0xff] %v337
                  %v339 = vld [vmem:[%s333 + $0x10] sm:$0xff]
                  %340 = vst [vmem:[%s334 + $0x10] sm:$0xff] %v339
                  %v341 = vld [vmem:[%s333 + $0x18] sm:$0xff]
                  %342 = vst [vmem:[%s334 + $0x18] sm:$0xff] %v341
                  %v343 = vld [vmem:[%s333 + $0x20] sm:$0xff]
                  %344 = vst [vmem:[%s334 + $0x20] sm:$0xff] %v343
                  %v345 = vld [vmem:[%s333 + $0x28] sm:$0xff]
                  %346 = vst [vmem:[%s334 + $0x28] sm:$0xff] %v345
                  %v347 = vld [vmem:[%s333 + $0x30] sm:$0xff]
                  %348 = vst [vmem:[%s334 + $0x30] sm:$0xff] %v347
                  %v349 = vld [vmem:[%s333 + $0x38] sm:$0xff]
                  %350 = vst [vmem:[%s334 + $0x38] sm:$0xff] %v349
                  %v351 = vld [vmem:[%s333 + $0x14] sm:$0xff]
                  %352 = vst [vmem:[%s334 + $0xc] sm:$0xff] %v351
                  %v353 = vld [vmem:[%s333 + $0x1c] sm:$0xff]
                  %354 = vst [vmem:[%s334 + $0x14] sm:$0xff] %v353
                  %v355 = vld [vmem:[%s333 + $0x24] sm:$0xff]
                  %356 = vst [vmem:[%s334 + $0x1c] sm:$0xff] %v355
                  %v357 = vld [vmem:[%s333 + $0x2c] sm:$0xff]
                  %358 = vst [vmem:[%s334 + $0x24] sm:$0xff] %v357
                  %v359 = vld [vmem:[%s333 + $0x34] sm:$0xff]
                  %360 = vst [vmem:[%s334 + $0x2c] sm:$0xff] %v359
                  %v361 = vld [vmem:[%s333 + $0x3c] sm:$0xff]
                  %362 = vst [vmem:[%s334 + $0x34] sm:$0xff] %v361
                  %v363 = vld [vmem:[%s333 + $0x44] sm:$0xff]
                  %364 = vst [vmem:[%s334 + $0x3c] sm:$0xff] %v363
                  %v365 = vld [vmem:[%s333 + $0x4c] sm:$0xff]
                  %366 = vst [vmem:[%s334 + $0x44] sm:$0xff] %v365
                  %v367 = vld [vmem:[%s333 + $0x28] sm:$0xff]
                  %368 = vst [vmem:[%s334 + $0x18] sm:$0xff] %v367
                  %v369 = vld [vmem:[%s333 + $0x30] sm:$0xff]
                  %370 = vst [vmem:[%s334 + $0x20] sm:$0xff] %v369
                  %v371 = vld [vmem:[%s333 + $0x38] sm:$0xff]
                  %372 = vst [vmem:[%s334 + $0x28] sm:$0xff] %v371
                  %v373 = vld [vmem:[%s333 + $0x40] sm:$0xff]
                  %374 = vst [vmem:[%s334 + $0x30] sm:$0xff] %v373
                  %v375 = vld [vmem:[%s333 + $0x48] sm:$0xff]
                  %376 = vst [vmem:[%s334 + $0x38] sm:$0xff] %v375
                  %v377 = vld [vmem:[%s333 + $0x50] sm:$0xff]
                  %378 = vst [vmem:[%s334 + $0x40] sm:$0xff] %v377
                  %v379 = vld [vmem:[%s333 + $0x58] sm:$0xff]
                  %380 = vst [vmem:[%s334 + $0x48] sm:$0xff] %v379
                  %v381 = vld [vmem:[%s333 + $0x60] sm:$0xff]
                  %382 = vst [vmem:[%s334 + $0x50] sm:$0xff] %v381
                  %v383 = vld [vmem:[%s333 + $0x3c] sm:$0xff]
                  %384 = vst [vmem:[%s334 + $0x24] sm:$0xff] %v383
                  %v385 = vld [vmem:[%s333 + $0x44] sm:$0xff]
                  %386 = vst [vmem:[%s334 + $0x2c] sm:$0xff] %v385
                  %v387 = vld [vmem:[%s333 + $0x4c] sm:$0xff]
                  %388 = vst [vmem:[%s334 + $0x34] sm:$0xff] %v387
                  %v389 = vld [vmem:[%s333 + $0x54] sm:$0xff]
                  %390 = vst [vmem:[%s334 + $0x3c] sm:$0xff] %v389
                  %v391 = vld [vmem:[%s333 + $0x5c] sm:$0xff]
                  %392 = vst [vmem:[%s334 + $0x44] sm:$0xff] %v391
                  %v393 = vld [vmem:[%s333 + $0x64] sm:$0xff]
                  %394 = vst [vmem:[%s334 + $0x4c] sm:$0xff] %v393
                  %v395 = vld [vmem:[%s333 + $0x6c] sm:$0xff]
                  %396 = vst [vmem:[%s334 + $0x54] sm:$0xff] %v395
                  %v397 = vld [vmem:[%s333 + $0x74] sm:$0xff]
                  %398 = vst [vmem:[%s334 + $0x5c] sm:$0xff] %v397
                  %s399 = sadd.s32 1, %s332
                  %p400 = scmp.ge.s32.totalorder %s399, %s325
                  %s401 = scalar_select %p400, 0, %s399
                  %s402 = smul.u32 %s401, 64
                  %s403 = smul.u32 %s401, 64
                  %s404 = scalar_lea.vmem %s168, %s402
                  %s405 = scalar_lea.vmem %s158, %s403 [#allocation2]
                $region70: #{temporal_stabilization.1} parent=64 // loop_footer
                  %s329 = sadd.s32 %s327, 1
                $region71: #{temporal_stabilization.1} parent=64 // loop_footer_branch
                  %326 = sbr.rel target = $region67
                $region72: #{temporal_stabilization.1} parent=64 // loop_exit
                  _
                %s406 = sshrl.u32 %s324, 3
                %s407 = sand.u32 %s324, 7
                %s408 = smul.u32 %s406, 8
                %s409 = smul.u32 8, %s408
                %s410 = scalar_lea.vmem %s168, %s409
                %s411 = smul.u32 8, %s408
                %s412 = scalar_lea.vmem %s158, %s411 [#allocation2]
                // While loop
                $region73: #{temporal_stabilization.1} parent=64 // loop_pre_header
                  _
                $region74: #{temporal_stabilization.1} parent=64 // loop_header
                  %s414 = sphi 0, %s416
                  %p415 = scmp.ge.s32.totalorder %s414, %s407
                  %s419 = sphi 0, %s432
                  %s420 = sphi %s410, %s435
                  %s421 = sphi %s412, %s436
                $region75: #{temporal_stabilization.1} parent=64 // loop_header_branch
                  %418 = sbr.rel (%p415) target = $region79
                $region76: #{temporal_stabilization.1} parent=64 // loop_body
                  %v422 = vld [vmem:[%s420] sm:$0xff]
                  %423 = vst [vmem:[%s421] sm:$0xff] %v422
                  %v424 = vld [vmem:[%s420 + $0x14] sm:$0xff]
                  %425 = vst [vmem:[%s421 + $0xc] sm:$0xff] %v424
                  %v426 = vld [vmem:[%s420 + $0x28] sm:$0xff]
                  %427 = vst [vmem:[%s421 + $0x18] sm:$0xff] %v426
                  %v428 = vld [vmem:[%s420 + $0x3c] sm:$0xff]
                  %429 = vst [vmem:[%s421 + $0x24] sm:$0xff] %v428
                  %s430 = sadd.s32 1, %s419
                  %p431 = scmp.ge.s32.totalorder %s430, %s407
                  %s432 = scalar_select %p431, 0, %s430
                  %s433 = smul.u32 %s432, 8
                  %s434 = smul.u32 %s432, 8
                  %s435 = scalar_lea.vmem %s410, %s433
                  %s436 = scalar_lea.vmem %s412, %s434 [#allocation2]
                $region77: #{temporal_stabilization.1} parent=64 // loop_footer
                  %s416 = sadd.s32 %s414, 1
                $region78: #{temporal_stabilization.1} parent=64 // loop_footer_branch
                  %413 = sbr.rel target = $region74
                $region79: #{temporal_stabilization.1} parent=64 // loop_exit
                  _
                %s437 = sshll.u32 1, %s319
                %s438 = ssub.s32 %s437, 1
                loop: start=0, step=1, limit=1
                $region80: #{temporal_stabilization.1} parent=64 // loop_pre_header
                  _
                $region81: #{temporal_stabilization.1} parent=64 // loop_header
                  %s440 = sphi 0, %s444
                  %p441 = scmp.ge.s32.totalorder %s440, 1
                  %s445 = sphi %s321, %s321
                  %s446 = sphi %s323, %s323
                $region82: #{temporal_stabilization.1} parent=64 // loop_header_branch
                  %443 = sbr.rel (%p441) target = $region86
                $region83: #{temporal_stabilization.1} parent=64 // loop_body
                  %v447 = vld [vmem:[%s445] sm:%s438]
                  %448 = vst [vmem:[%s446] sm:%s438] %v447
                  %v449 = vld [vmem:[%s445 + $0x14] sm:%s438]
                  %450 = vst [vmem:[%s446 + $0xc] sm:%s438] %v449
                  %v451 = vld [vmem:[%s445 + $0x28] sm:%s438]
                  %452 = vst [vmem:[%s446 + $0x18] sm:%s438] %v451
                  %v453 = vld [vmem:[%s445 + $0x3c] sm:%s438]
                  %454 = vst [vmem:[%s446 + $0x24] sm:%s438] %v453
                $region84: #{temporal_stabilization.1} parent=64 // loop_footer
                  %s444 = sadd.s32 1, %s440
                $region85: #{temporal_stabilization.1} parent=64 // loop_footer_branch
                  %439 = sbr.rel target = $region81
                $region86: #{temporal_stabilization.1} parent=64 // loop_exit
                  _
              $region65: #{temporal_stabilization.1} parent=31 // pred_fallthru
                _
            $region32: #{temporal_stabilization.1} parent=27 // pred_fallthru
              _
            // Predicated region
            $region33: #{temporal_stabilization.1} parent=27 // pred_check
              %p177 = pneg %p173
            $region34: #{temporal_stabilization.1} parent=27 // pred_check_branch
              %179 = sbr.rel (%p177) target = $region36
            $region35: #{temporal_stabilization.1} parent=27 // pred_region
              %s180 = sshll.u32 1, %s169
              %s181 = ssub.s32 %s180, 1
              loop: start=0, step=1, limit=1
              $region37: #{temporal_stabilization.1} parent=35 // loop_pre_header
                _
              $region38: #{temporal_stabilization.1} parent=35 // loop_header
                %s183 = sphi 0, %s187
                %p184 = scmp.ge.s32.totalorder %s183, 1
                %s188 = sphi %s168, %s168
                %s189 = sphi %s158, %s158
              $region39: #{temporal_stabilization.1} parent=35 // loop_header_branch
                %186 = sbr.rel (%p184) target = $region43
              $region40: #{temporal_stabilization.1} parent=35 // loop_body
                %v190 = vld [vmem:[%s188] sm:%s181]
                %191 = vst [vmem:[%s189] sm:%s181] %v190
                %v192 = vld [vmem:[%s188 + $0x14] sm:%s181]
                %193 = vst [vmem:[%s189 + $0xc] sm:%s181] %v192
                %v194 = vld [vmem:[%s188 + $0x28] sm:%s181]
                %195 = vst [vmem:[%s189 + $0x18] sm:%s181] %v194
                %v196 = vld [vmem:[%s188 + $0x3c] sm:%s181]
                %197 = vst [vmem:[%s189 + $0x24] sm:%s181] %v196
              $region41: #{temporal_stabilization.1} parent=35 // loop_footer
                %s187 = sadd.s32 1, %s183
              $region42: #{temporal_stabilization.1} parent=35 // loop_footer_branch
                %182 = sbr.rel target = $region38
              $region43: #{temporal_stabilization.1} parent=35 // loop_exit
                _
            $region36: #{temporal_stabilization.1} parent=27 // pred_fallthru
              _
          $region28: #{temporal_stabilization.1} parent=23 // pred_fallthru
            _
          %455 = vnop
        $region24: #{temporal_stabilization.1} parent=19 // pred_fallthru
          _
        // Predicated region
        $region87: #{temporal_stabilization.1} parent=19 // pred_check
          %p456 = pneg %p75
        $region88: #{temporal_stabilization.1} parent=19 // pred_check_branch
          %458 = sbr.rel (%p456) target = $region90
        $region89: #{temporal_stabilization.1} parent=19 // pred_region
          %s459 = sand.u32 %s65, 1
          %s460 = sand.u32 %s65, 1
          %s461 = smul.addr %s460, 16
          %s462 = scalar_lea.vmem [#allocation3], %s461
          %s463 = sadd.s32 %s17, 1
          %s464 = smul.u32 %s463, 3
          %s465 = smul.addr %s16, 20
          %s466 = sadd.s32 %s464, %s465
          %s467 = smul.addr %s466, 4
          %s468 = scalar_lea.vmem %s1, %s467
          // Predicated region
          $region91: #{temporal_stabilization.1} parent=89 // pred_check
            _
          $region92: #{temporal_stabilization.1} parent=89 // pred_check_branch
            %470 = sbr.rel (0) target = $region94
          $region93: #{temporal_stabilization.1} parent=89 // pred_region
            // Predicated region
            $region95: #{temporal_stabilization.1} parent=93 // pred_check
              _
            $region96: #{temporal_stabilization.1} parent=93 // pred_check_branch
              %472 = sbr.rel target = $region98
            $region97: #{temporal_stabilization.1} parent=93 // pred_region
              // Predicated region
              $region110: #{temporal_stabilization.1} parent=97 // pred_check
                _
              $region111: #{temporal_stabilization.1} parent=97 // pred_check_branch
                %494 = sbr.rel (0) target = $region113
              $region112: #{temporal_stabilization.1} parent=97 // pred_region
                loop: start=0, step=1, limit=1
                $region114: #{temporal_stabilization.1} parent=112 // loop_pre_header
                  _
                $region115: #{temporal_stabilization.1} parent=112 // loop_header
                  %s496 = sphi 0, %s500
                  %p497 = scmp.ge.s32.totalorder %s496, 1
                  %s501 = sphi %s468, %s468
                  %s502 = sphi %s462, %s462
                $region116: #{temporal_stabilization.1} parent=112 // loop_header_branch
                  %499 = sbr.rel (%p497) target = $region120
                $region117: #{temporal_stabilization.1} parent=112 // loop_body
                  _
                $region118: #{temporal_stabilization.1} parent=112 // loop_footer
                  %s500 = sadd.s32 1, %s496
                $region119: #{temporal_stabilization.1} parent=112 // loop_footer_branch
                  %495 = sbr.rel target = $region115
                $region120: #{temporal_stabilization.1} parent=112 // loop_exit
                  _
                %s504 = ssub.s32 16, 1
                loop: start=0, step=1, limit=1
                $region121: #{temporal_stabilization.1} parent=112 // loop_pre_header
                  _
                $region122: #{temporal_stabilization.1} parent=112 // loop_header
                  %s506 = sphi 0, %s510
                  %p507 = scmp.ge.s32.totalorder %s506, 1
                  %s511 = sphi %s468, %s468
                  %s512 = sphi %s462, %s462
                $region123: #{temporal_stabilization.1} parent=112 // loop_header_branch
                  %509 = sbr.rel (%p507) target = $region127
                $region124: #{temporal_stabilization.1} parent=112 // loop_body
                  %v513 = vld [vmem:[%s511] sm:%s504]
                  %514 = vst [vmem:[%s512] sm:%s504] %v513
                  %v515 = vld [vmem:[%s511 + $0x14] sm:%s504]
                  %516 = vst [vmem:[%s512 + $0x4] sm:%s504] %v515
                  %v517 = vld [vmem:[%s511 + $0x28] sm:%s504]
                  %518 = vst [vmem:[%s512 + $0x8] sm:%s504] %v517
                  %v519 = vld [vmem:[%s511 + $0x3c] sm:%s504]
                  %520 = vst [vmem:[%s512 + $0xc] sm:%s504] %v519
                $region125: #{temporal_stabilization.1} parent=112 // loop_footer
                  %s510 = sadd.s32 1, %s506
                $region126: #{temporal_stabilization.1} parent=112 // loop_footer_branch
                  %505 = sbr.rel target = $region122
                $region127: #{temporal_stabilization.1} parent=112 // loop_exit
                  _
              $region113: #{temporal_stabilization.1} parent=97 // pred_fallthru
                _
            $region98: #{temporal_stabilization.1} parent=93 // pred_fallthru
              _
            // Predicated region
            $region99: #{temporal_stabilization.1} parent=93 // pred_check
              _
            $region100: #{temporal_stabilization.1} parent=93 // pred_check_branch
              %474 = sbr.rel (0) target = $region102
            $region101: #{temporal_stabilization.1} parent=93 // pred_region
              %s476 = ssub.s32 16, 1
              loop: start=0, step=1, limit=1
              $region103: #{temporal_stabilization.1} parent=101 // loop_pre_header
                _
              $region104: #{temporal_stabilization.1} parent=101 // loop_header
                %s478 = sphi 0, %s482
                %p479 = scmp.ge.s32.totalorder %s478, 1
                %s483 = sphi %s468, %s468
                %s484 = sphi %s462, %s462
              $region105: #{temporal_stabilization.1} parent=101 // loop_header_branch
                %481 = sbr.rel (%p479) target = $region109
              $region106: #{temporal_stabilization.1} parent=101 // loop_body
                %v485 = vld [vmem:[%s483] sm:%s476]
                %486 = vst [vmem:[%s484] sm:%s476] %v485
                %v487 = vld [vmem:[%s483 + $0x14] sm:%s476]
                %488 = vst [vmem:[%s484 + $0x4] sm:%s476] %v487
                %v489 = vld [vmem:[%s483 + $0x28] sm:%s476]
                %490 = vst [vmem:[%s484 + $0x8] sm:%s476] %v489
                %v491 = vld [vmem:[%s483 + $0x3c] sm:%s476]
                %492 = vst [vmem:[%s484 + $0xc] sm:%s476] %v491
              $region107: #{temporal_stabilization.1} parent=101 // loop_footer
                %s482 = sadd.s32 1, %s478
              $region108: #{temporal_stabilization.1} parent=101 // loop_footer_branch
                %477 = sbr.rel target = $region104
              $region109: #{temporal_stabilization.1} parent=101 // loop_exit
                _
            $region102: #{temporal_stabilization.1} parent=93 // pred_fallthru
              _
          $region94: #{temporal_stabilization.1} parent=89 // pred_fallthru
            _
          %521 = vnop
        $region90: #{temporal_stabilization.1} parent=19 // pred_fallthru
          _
      $region20: #{temporal_stabilization.1} parent=5 // pred_fallthru
        _
      %p522 = scmp.le.s32.totalorder 1, %s9
      %p523 = scmp.lt.s32.totalorder %s9, 3
      %p524 = pnand %p522, %p523
      %p525 = pneg %p524
      // Predicated region
      $region128: #{temporal_stabilization.1} parent=5 // pred_check
        _
      $region129: #{temporal_stabilization.1} parent=5 // pred_check_branch
        %527 = sbr.rel (%p524) target = $region131
      $region130: #{temporal_stabilization.1} parent=5 // pred_region
        %s528 = ssub.s32 %s9, 1
        %s529 = sand.u32 %s36, 1
        %s530 = sand.u32 %s36, 1
        %s531 = smul.addr %s530, 48
        %s532 = scalar_lea.vmem [#allocation2], %s531
        // Predicated region
        $region132: #{temporal_stabilization.1} parent=130 // pred_check
          %p533 = pneg %p49
        $region133: #{temporal_stabilization.1} parent=130 // pred_check_branch
          %535 = sbr.rel (%p533) target = $region135
        $region134: #{temporal_stabilization.1} parent=130 // pred_region
          _
        $region135: #{temporal_stabilization.1} parent=130 // pred_fallthru
          _
        %s536 = sand.u32 %s68, 1
        %s537 = sand.u32 %s68, 1
        %s538 = smul.addr %s537, 16
        %s539 = scalar_lea.vmem [#allocation3], %s538
        // Predicated region
        $region136: #{temporal_stabilization.1} parent=130 // pred_check
          %p540 = pneg %p81
        $region137: #{temporal_stabilization.1} parent=130 // pred_check_branch
          %542 = sbr.rel (%p540) target = $region139
        $region138: #{temporal_stabilization.1} parent=130 // pred_region
          _
        $region139: #{temporal_stabilization.1} parent=130 // pred_fallthru
          _
        %s543 = sand.u32 %s36, 1
        %s544 = sand.u32 %s36, 1
        %s545 = smul.addr %s544, 48
        %s546 = scalar_lea.vmem [#allocation2], %s545
        %p547 = pneg %p49
        %p548 = pneg %p46
        %s549 = sand.u32 %s68, 1
        %s550 = sand.u32 %s68, 1
        %s551 = smul.addr %s550, 16
        %s552 = scalar_lea.vmem [#allocation3], %s551
        %p553 = pneg %p81
        %p554 = pneg %p78
        %p555 = pneg %p102
        %p556 = pneg %p99
        %p557 = pneg %p130
        %p558 = pneg %p127
        %s559 = smul.u32 3, %s19
        %p560 = scmp.lt.s32.totalorder %s18, 1
        %s561 = scalar_select %p560, %s18, 1
        %p562 = scmp.lt.s32.totalorder %s559, 2
        %s563 = scalar_select %p562, %s559, 2
        %s564 = smul.addr %s561, 3
        %s565 = sadd.s32 %s563, %s564
        %s566 = scalar_lea.vmem %s3, %s565
        %s567 = smul.u32 3, %s19
        %s568 = ssub.s32 5, %s567
        %p569 = scmp.lt.s32.totalorder %s568, 3
        %s570 = scalar_select %p569, %s568, 3
        %s571 = smul.u32 16, %s570
        %s572 = sadd.s32 %s19, 1
        %s573 = smul.u32 %s572, 3
        %s574 = smul.u32 3, %s19
        %p575 = scmp.lt.s32.totalorder %s18, 1
        %s576 = scalar_select %p575, %s18, 1
        %p577 = scmp.lt.s32.totalorder %s574, 2
        %s578 = scalar_select %p577, %s574, 2
        %s579 = smul.addr %s576, 3
        %s580 = sadd.s32 %s578, %s579
        %s581 = scalar_lea.vmem %s3, %s580
        %s582 = smul.u32 3, %s19
        %v585 = vld [vmem:[%s532] sm:$0xff]
        %v586 = vld [vmem:[%s532 + $0x8] sm:$0xf]
        %v587 = vld [vmem:[%s532 + $0xc] sm:$0xff]
        %v588 = vld [vmem:[%s532 + $0x14] sm:$0xf]
        %v589 = vld [vmem:[%s532 + $0x18] sm:$0xff]
        %v590 = vld [vmem:[%s532 + $0x20] sm:$0xf]
        %v591 = vld [vmem:[%s532 + $0x24] sm:$0xff]
        %v592 = vld [vmem:[%s532 + $0x2c] sm:$0xf]
        %v593 = vld [vmem:[%s539] sm:$0xf]
        %v594 = vld [vmem:[%s539 + $0x4] sm:$0xf]
        %v595 = vld [vmem:[%s539 + $0x8] sm:$0xf]
        %v596 = vld [vmem:[%s539 + $0xc] sm:$0xf]
        %v605 = vunpack.c.l.b16 %v585
        %v606 = vunpack.c.h.b16 %v585
        %v607 = vunpack.c.l.b16 %v586
        %v608 = vunpack.c.l.b16 %v587
        %v609 = vunpack.c.h.b16 %v587
        %v610 = vunpack.c.l.b16 %v588
        %v611 = vunpack.c.l.b16 %v589
        %v612 = vunpack.c.h.b16 %v589
        %v613 = vunpack.c.l.b16 %v590
        %v614 = vunpack.c.l.b16 %v591
        %v615 = vunpack.c.h.b16 %v591
        %v616 = vunpack.c.l.b16 %v592
        %v617 = vpack.c.b16 %v608, %v605
        %v618 = vpack.c.b16 %v609, %v606
        %v619 = vpack.c.b16 %v610, %v607
        %v620 = vpack.c.b16 %v614, %v611
        %v621 = vpack.c.b16 %v615, %v612
        %v622 = vpack.c.b16 %v616, %v613
        %v633 = vunpack.c.l.b16 %v593
        %v634 = vunpack.c.l.b16 %v594
        %v635 = vunpack.c.l.b16 %v595
        %v636 = vunpack.c.l.b16 %v596
        %v637 = vpack.c.b16 %v634, %v633
        %v638 = vpack.c.b16 %v636, %v635
        %640 = vrot.lane.b32.xlu0 %v617, 127
        %v641 = vpop.permute.xlu0 %640
        %642 = vrot.lane.b32.xlu0 %v618, 127
        %v643 = vpop.permute.xlu0 %642
        %644 = vrot.lane.b32.xlu0 %v619, 127
        %v645 = vpop.permute.xlu0 %644
        %646 = vrot.lane.b32.xlu0 %v637, 127
        %v647 = vpop.permute.xlu0 %646
        %vm648 = vcmask 1039360
        %v649 = vsel %vm648, %v641, %v643
        %v650 = vsel %vm648, %v643, %v645
        %v651 = vsel %vm648, %v645, %v647
        %655 = vrot.lane.b32.xlu0 %v617, 126
        %v656 = vpop.permute.xlu0 %655
        %657 = vrot.lane.b32.xlu0 %v618, 126
        %v658 = vpop.permute.xlu0 %657
        %659 = vrot.lane.b32.xlu0 %v619, 126
        %v660 = vpop.permute.xlu0 %659
        %661 = vrot.lane.b32.xlu0 %v637, 126
        %v662 = vpop.permute.xlu0 %661
        %vm663 = vcmask 1031168
        %v664 = vsel %vm663, %v656, %v658
        %v665 = vsel %vm663, %v658, %v660
        %v666 = vsel %vm663, %v660, %v662
        %670 = vrot.lane.b32.xlu0 %v617, 110
        %v671 = vpop.permute.xlu0 %670
        %672 = vrot.lane.b32.xlu0 %v618, 110
        %v673 = vpop.permute.xlu0 %672
        %674 = vrot.lane.b32.xlu0 %v619, 110
        %v675 = vpop.permute.xlu0 %674
        %676 = vrot.lane.b32.xlu0 %v637, 110
        %v677 = vpop.permute.xlu0 %676
        %vm678 = vcmask 900096
        %v679 = vsel %vm678, %v671, %v673
        %v680 = vsel %vm678, %v673, %v675
        %v681 = vsel %vm678, %v675, %v677
        %685 = vrot.lane.b32.xlu0 %v617, 109
        %v686 = vpop.permute.xlu0 %685
        %687 = vrot.lane.b32.xlu0 %v618, 109
        %v688 = vpop.permute.xlu0 %687
        %689 = vrot.lane.b32.xlu0 %v619, 109
        %v690 = vpop.permute.xlu0 %689
        %691 = vrot.lane.b32.xlu0 %v637, 109
        %v692 = vpop.permute.xlu0 %691
        %vm693 = vcmask 891904
        %v694 = vsel %vm693, %v686, %v688
        %v695 = vsel %vm693, %v688, %v690
        %v696 = vsel %vm693, %v690, %v692
        %700 = vrot.lane.b32.xlu0 %v617, 108
        %v701 = vpop.permute.xlu0 %700
        %702 = vrot.lane.b32.xlu0 %v618, 108
        %v703 = vpop.permute.xlu0 %702
        %704 = vrot.lane.b32.xlu0 %v619, 108
        %v705 = vpop.permute.xlu0 %704
        %706 = vrot.lane.b32.xlu0 %v637, 108
        %v707 = vpop.permute.xlu0 %706
        %vm708 = vcmask 883712
        %v709 = vsel %vm708, %v701, %v703
        %v710 = vsel %vm708, %v703, %v705
        %v711 = vsel %vm708, %v705, %v707
        %715 = vrot.lane.b32.xlu0 %v617, 92
        %v716 = vpop.permute.xlu0 %715
        %717 = vrot.lane.b32.xlu0 %v618, 92
        %v718 = vpop.permute.xlu0 %717
        %719 = vrot.lane.b32.xlu0 %v619, 92
        %v720 = vpop.permute.xlu0 %719
        %721 = vrot.lane.b32.xlu0 %v637, 92
        %v722 = vpop.permute.xlu0 %721
        %vm723 = vcmask 752640
        %v724 = vsel %vm723, %v716, %v718
        %v725 = vsel %vm723, %v718, %v720
        %v726 = vsel %vm723, %v720, %v722
        %730 = vrot.lane.b32.xlu0 %v617, 91
        %v731 = vpop.permute.xlu0 %730
        %732 = vrot.lane.b32.xlu0 %v618, 91
        %v733 = vpop.permute.xlu0 %732
        %734 = vrot.lane.b32.xlu0 %v619, 91
        %v735 = vpop.permute.xlu0 %734
        %736 = vrot.lane.b32.xlu0 %v637, 91
        %v737 = vpop.permute.xlu0 %736
        %vm738 = vcmask 744448
        %v739 = vsel %vm738, %v731, %v733
        %v740 = vsel %vm738, %v733, %v735
        %v741 = vsel %vm738, %v735, %v737
        %745 = vrot.lane.b32.xlu0 %v617, 90
        %v746 = vpop.permute.xlu0 %745
        %747 = vrot.lane.b32.xlu0 %v618, 90
        %v748 = vpop.permute.xlu0 %747
        %749 = vrot.lane.b32.xlu0 %v619, 90
        %v750 = vpop.permute.xlu0 %749
        %751 = vrot.lane.b32.xlu0 %v637, 90
        %v752 = vpop.permute.xlu0 %751
        %vm753 = vcmask 736256
        %v754 = vsel %vm753, %v746, %v748
        %v755 = vsel %vm753, %v748, %v750
        %v756 = vsel %vm753, %v750, %v752
        %v760 = vld [vmem:[%s2] sm:$0xff]
        %v761 = vld [vmem:[%s2 + $0x8] sm:$0xff]
        %v762 = vld [vmem:[%s2 + $0x10] sm:$0xff]
        %v763 = vld [vmem:[%s2 + $0x18] sm:$0xff]
        %v764 = vld [vmem:[%s2 + $0x20] sm:$0xff]
        %v765 = vld [vmem:[%s2 + $0x28] sm:$0xff]
        %v766 = vld [vmem:[%s2 + $0x30] sm:$0xff]
        %v767 = vld [vmem:[%s2 + $0x38] sm:$0xff]
        %v768 = vld [vmem:[%s2 + $0x40] sm:$0xff]
        %v769 = vld [vmem:[%s2 + $0x48] sm:$0xff]
        %v770 = vld [vmem:[%s2 + $0x50] sm:$0xff]
        %v771 = vld [vmem:[%s2 + $0x58] sm:$0xff]
        %v772 = vld [vmem:[%s2 + $0x60] sm:$0xff]
        %v773 = vld [vmem:[%s2 + $0x68] sm:$0xff]
        %v774 = vld [vmem:[%s2 + $0x70] sm:$0xff]
        %v775 = vld [vmem:[%s2 + $0x78] sm:$0xff]
        %v776 = vld [vmem:[%s2 + $0x80] sm:$0xff]
        %v777 = vld [vmem:[%s2 + $0x88] sm:$0xff]
        %v778 = vld [vmem:[%s2 + $0x90] sm:$0x11]
        %v798 = vunpack.c.l.b16 %v760
        %v799 = vunpack.c.h.b16 %v760
        %v800 = vunpack.c.l.b16 %v761
        %v801 = vunpack.c.h.b16 %v761
        %v802 = vunpack.c.l.b16 %v762
        %v803 = vunpack.c.h.b16 %v762
        %v804 = vunpack.c.l.b16 %v763
        %v805 = vunpack.c.h.b16 %v763
        %v806 = vunpack.c.l.b16 %v764
        %v807 = vunpack.c.h.b16 %v764
        %v808 = vunpack.c.l.b16 %v765
        %v809 = vunpack.c.h.b16 %v765
        %v810 = vunpack.c.l.b16 %v766
        %v811 = vunpack.c.h.b16 %v766
        %v812 = vunpack.c.l.b16 %v767
        %v813 = vunpack.c.h.b16 %v767
        %v814 = vunpack.c.l.b16 %v768
        %v815 = vunpack.c.h.b16 %v768
        %v816 = vunpack.c.l.b16 %v769
        %v817 = vunpack.c.h.b16 %v769
        %v818 = vunpack.c.l.b16 %v770
        %v819 = vunpack.c.h.b16 %v770
        %v820 = vunpack.c.l.b16 %v771
        %v821 = vunpack.c.h.b16 %v771
        %v822 = vunpack.c.l.b16 %v772
        %v823 = vunpack.c.h.b16 %v772
        %v824 = vunpack.c.l.b16 %v773
        %v825 = vunpack.c.h.b16 %v773
        %v826 = vunpack.c.l.b16 %v774
        %v827 = vunpack.c.h.b16 %v774
        %v828 = vunpack.c.l.b16 %v775
        %v829 = vunpack.c.h.b16 %v775
        %v830 = vunpack.c.l.b16 %v776
        %v831 = vunpack.c.h.b16 %v776
        %v832 = vunpack.c.l.b16 %v777
        %v833 = vunpack.c.h.b16 %v777
        %v834 = vunpack.c.l.b16 %v778
        %v835 = vunpack.c.h.b16 %v778
        %v836 = vpack.c.b16 %v800, %v798
        %v837 = vpack.c.b16 %v801, %v799
        %v838 = vpack.c.b16 %v804, %v802
        %v839 = vpack.c.b16 %v805, %v803
        %v840 = vpack.c.b16 %v808, %v806
        %v841 = vpack.c.b16 %v809, %v807
        %v842 = vpack.c.b16 %v812, %v810
        %v843 = vpack.c.b16 %v813, %v811
        %v844 = vpack.c.b16 %v816, %v814
        %v845 = vpack.c.b16 %v817, %v815
        %v846 = vpack.c.b16 %v820, %v818
        %v847 = vpack.c.b16 %v821, %v819
        %v848 = vpack.c.b16 %v824, %v822
        %v849 = vpack.c.b16 %v825, %v823
        %v850 = vpack.c.b16 %v828, %v826
        %v851 = vpack.c.b16 %v829, %v827
        %v852 = vpack.c.b16 %v832, %v830
        %v853 = vpack.c.b16 %v833, %v831
        %v854 = vpack.c.b16 %v834, %v834
        %v855 = vpack.c.b16 %v835, %v835
        %vm866 = vcmask 138240
        %v868 = vsel %vm866, %v837, 0
        %v871 = vsel %vm866, %v839, 0
        %v874 = vsel %vm866, %v841, 0
        %v877 = vsel %vm866, %v843, 0
        %v880 = vsel %vm866, %v845, 0
        %v883 = vsel %vm866, %v847, 0
        %v886 = vsel %vm866, %v849, 0
        %v889 = vsel %vm866, %v851, 0
        %v892 = vsel %vm866, %v853, 0
        %v895 = vsel %vm866, %v855, 0
        %vm897 = vcmask 1040384
        %v898 = vsel 0, 4294967295, 65535
        %v899 = vsel %vm897, %v898, 0
        %v901 = vand.u32 1065369472, %v899
        %903 = vmatpush.bf16.msra.mxu0 %v739
        %904 = vmatpush.bf16.msra.mxu0 %v724
        %905 = vmatpush.bf16.msra.mxu0 %v709
        %906 = vmatpush.bf16.msra.mxu0 %v694
        %907 = vmatpush.bf16.msra.mxu0 %v679
        %908 = vmatpush.bf16.msra.mxu0 %v664
        %909 = vmatpush.bf16.msra.mxu0 %v649
        %910 = vmatpush.bf16.msra.mxu0 %v617
        %911 = vmatmul.bf16.gmra.mxu0 %v836
        %v912 = vpop.f32.mrf.mxu0
        %v913 = vadd.f32 0.0, %v912
        %v914 = vpop.f32.mrf.mxu0
        %v915 = vadd.f32 0.0, %v914
        %916 = vmatmul.bf16.gmra.mxu0 %v838
        %v917 = vpop.f32.mrf.mxu0
        %v918 = vadd.f32 0.0, %v917
        %v919 = vpop.f32.mrf.mxu0
        %v920 = vadd.f32 0.0, %v919
        %921 = vmatmul.bf16.gmra.mxu0 %v840
        %v922 = vpop.f32.mrf.mxu0
        %v923 = vadd.f32 0.0, %v922
        %v924 = vpop.f32.mrf.mxu0
        %v925 = vadd.f32 0.0, %v924
        %926 = vmatmul.bf16.gmra.mxu0 %v842
        %v927 = vpop.f32.mrf.mxu0
        %v928 = vadd.f32 0.0, %v927
        %v929 = vpop.f32.mrf.mxu0
        %v930 = vadd.f32 0.0, %v929
        %931 = vmatmul.bf16.gmra.mxu0 %v844
        %v932 = vpop.f32.mrf.mxu0
        %v933 = vadd.f32 0.0, %v932
        %v934 = vpop.f32.mrf.mxu0
        %v935 = vadd.f32 0.0, %v934
        %936 = vmatmul.bf16.gmra.mxu0 %v846
        %v937 = vpop.f32.mrf.mxu0
        %v938 = vadd.f32 0.0, %v937
        %v939 = vpop.f32.mrf.mxu0
        %v940 = vadd.f32 0.0, %v939
        %941 = vmatmul.bf16.gmra.mxu0 %v848
        %v942 = vpop.f32.mrf.mxu0
        %v943 = vadd.f32 0.0, %v942
        %v944 = vpop.f32.mrf.mxu0
        %v945 = vadd.f32 0.0, %v944
        %946 = vmatmul.bf16.gmra.mxu0 %v850
        %v947 = vpop.f32.mrf.mxu0
        %v948 = vadd.f32 0.0, %v947
        %v949 = vpop.f32.mrf.mxu0
        %v950 = vadd.f32 0.0, %v949
        %951 = vmatmul.bf16.gmra.mxu0 %v852
        %v952 = vpop.f32.mrf.mxu0
        %v953 = vadd.f32 0.0, %v952
        %v954 = vpop.f32.mrf.mxu0
        %v955 = vadd.f32 0.0, %v954
        %956 = vmatmul.bf16.gmra.mxu0 %v854
        %v957 = vpop.f32.mrf.mxu0
        %v958 = vadd.f32 0.0, %v957
        %v959 = vpop.f32.mrf.mxu0
        %960 = vdwg.mxu0
        %961 = vmatpush.bf16.msra.mxu0 0
        %962 = vmatpush.bf16.msra.mxu0 0
        %963 = vmatpush.bf16.msra.mxu0 0
        %964 = vmatpush.bf16.msra.mxu0 0
        %965 = vmatpush.bf16.msra.mxu0 0
        %966 = vmatpush.bf16.msra.mxu0 0
        %967 = vmatpush.bf16.msra.mxu0 %v901
        %968 = vmatpush.bf16.msra.mxu0 %v754
        %969 = vmatmul.bf16.gmra.mxu0 %v868
        %v970 = vpop.f32.mrf.mxu0
        %v971 = vadd.f32 %v913, %v970
        %v972 = vpop.f32.mrf.mxu0
        %v973 = vadd.f32 %v915, %v972
        %974 = vmatmul.bf16.gmra.mxu0 %v871
        %v975 = vpop.f32.mrf.mxu0
        %v976 = vadd.f32 %v918, %v975
        %v977 = vpop.f32.mrf.mxu0
        %v978 = vadd.f32 %v920, %v977
        %979 = vmatmul.bf16.gmra.mxu0 %v874
        %v980 = vpop.f32.mrf.mxu0
        %v981 = vadd.f32 %v923, %v980
        %v982 = vpop.f32.mrf.mxu0
        %v983 = vadd.f32 %v925, %v982
        %984 = vmatmul.bf16.gmra.mxu0 %v877
        %v985 = vpop.f32.mrf.mxu0
        %v986 = vadd.f32 %v928, %v985
        %v987 = vpop.f32.mrf.mxu0
        %v988 = vadd.f32 %v930, %v987
        %989 = vmatmul.bf16.gmra.mxu0 %v880
        %v990 = vpop.f32.mrf.mxu0
        %v991 = vadd.f32 %v933, %v990
        %v992 = vpop.f32.mrf.mxu0
        %v993 = vadd.f32 %v935, %v992
        %994 = vmatmul.bf16.gmra.mxu0 %v883
        %v995 = vpop.f32.mrf.mxu0
        %v996 = vadd.f32 %v938, %v995
        %v997 = vpop.f32.mrf.mxu0
        %v998 = vadd.f32 %v940, %v997
        %999 = vmatmul.bf16.gmra.mxu0 %v886
        %v1000 = vpop.f32.mrf.mxu0
        %v1001 = vadd.f32 %v943, %v1000
        %v1002 = vpop.f32.mrf.mxu0
        %v1003 = vadd.f32 %v945, %v1002
        %1004 = vmatmul.bf16.gmra.mxu0 %v889
        %v1005 = vpop.f32.mrf.mxu0
        %v1006 = vadd.f32 %v948, %v1005
        %v1007 = vpop.f32.mrf.mxu0
        %v1008 = vadd.f32 %v950, %v1007
        %1009 = vmatmul.bf16.gmra.mxu0 %v892
        %v1010 = vpop.f32.mrf.mxu0
        %v1011 = vadd.f32 %v953, %v1010
        %v1012 = vpop.f32.mrf.mxu0
        %v1013 = vadd.f32 %v955, %v1012
        %1014 = vmatmul.bf16.gmra.mxu0 %v895
        %v1015 = vpop.f32.mrf.mxu0
        %v1016 = vadd.f32 %v958, %v1015
        %v1017 = vpop.f32.mrf.mxu0
        %1018 = vdwg.mxu0
        %1019 = vmatpush.bf16.msra.mxu0 %v740
        %1020 = vmatpush.bf16.msra.mxu0 %v725
        %1021 = vmatpush.bf16.msra.mxu0 %v710
        %1022 = vmatpush.bf16.msra.mxu0 %v695
        %1023 = vmatpush.bf16.msra.mxu0 %v680
        %1024 = vmatpush.bf16.msra.mxu0 %v665
        %1025 = vmatpush.bf16.msra.mxu0 %v650
        %1026 = vmatpush.bf16.msra.mxu0 %v618
        %1027 = vmatmul.bf16.gmra.mxu0 %v836
        %v1028 = vpop.f32.mrf.mxu0
        %v1029 = vadd.f32 0.0, %v1028
        %v1030 = vpop.f32.mrf.mxu0
        %v1031 = vadd.f32 0.0, %v1030
        %1032 = vmatmul.bf16.gmra.mxu0 %v838
        %v1033 = vpop.f32.mrf.mxu0
        %v1034 = vadd.f32 0.0, %v1033
        %v1035 = vpop.f32.mrf.mxu0
        %v1036 = vadd.f32 0.0, %v1035
        %1037 = vmatmul.bf16.gmra.mxu0 %v840
        %v1038 = vpop.f32.mrf.mxu0
        %v1039 = vadd.f32 0.0, %v1038
        %v1040 = vpop.f32.mrf.mxu0
        %v1041 = vadd.f32 0.0, %v1040
        %1042 = vmatmul.bf16.gmra.mxu0 %v842
        %v1043 = vpop.f32.mrf.mxu0
        %v1044 = vadd.f32 0.0, %v1043
        %v1045 = vpop.f32.mrf.mxu0
        %v1046 = vadd.f32 0.0, %v1045
        %1047 = vmatmul.bf16.gmra.mxu0 %v844
        %v1048 = vpop.f32.mrf.mxu0
        %v1049 = vadd.f32 0.0, %v1048
        %v1050 = vpop.f32.mrf.mxu0
        %v1051 = vadd.f32 0.0, %v1050
        %1052 = vmatmul.bf16.gmra.mxu0 %v846
        %v1053 = vpop.f32.mrf.mxu0
        %v1054 = vadd.f32 0.0, %v1053
        %v1055 = vpop.f32.mrf.mxu0
        %v1056 = vadd.f32 0.0, %v1055
        %1057 = vmatmul.bf16.gmra.mxu0 %v848
        %v1058 = vpop.f32.mrf.mxu0
        %v1059 = vadd.f32 0.0, %v1058
        %v1060 = vpop.f32.mrf.mxu0
        %v1061 = vadd.f32 0.0, %v1060
        %1062 = vmatmul.bf16.gmra.mxu0 %v850
        %v1063 = vpop.f32.mrf.mxu0
        %v1064 = vadd.f32 0.0, %v1063
        %v1065 = vpop.f32.mrf.mxu0
        %v1066 = vadd.f32 0.0, %v1065
        %1067 = vmatmul.bf16.gmra.mxu0 %v852
        %v1068 = vpop.f32.mrf.mxu0
        %v1069 = vadd.f32 0.0, %v1068
        %v1070 = vpop.f32.mrf.mxu0
        %v1071 = vadd.f32 0.0, %v1070
        %1072 = vmatmul.bf16.gmra.mxu0 %v854
        %v1073 = vpop.f32.mrf.mxu0
        %v1074 = vadd.f32 0.0, %v1073
        %v1075 = vpop.f32.mrf.mxu0
        %1076 = vdwg.mxu0
        %1077 = vmatpush.bf16.msra.mxu0 0
        %1078 = vmatpush.bf16.msra.mxu0 0
        %1079 = vmatpush.bf16.msra.mxu0 0
        %1080 = vmatpush.bf16.msra.mxu0 0
        %1081 = vmatpush.bf16.msra.mxu0 0
        %1082 = vmatpush.bf16.msra.mxu0 0
        %1083 = vmatpush.bf16.msra.mxu0 %v901
        %1084 = vmatpush.bf16.msra.mxu0 %v755
        %1085 = vmatmul.bf16.gmra.mxu0 %v868
        %v1086 = vpop.f32.mrf.mxu0
        %v1087 = vadd.f32 %v1029, %v1086
        %v1088 = vpop.f32.mrf.mxu0
        %v1089 = vadd.f32 %v1031, %v1088
        %1090 = vmatmul.bf16.gmra.mxu0 %v871
        %v1091 = vpop.f32.mrf.mxu0
        %v1092 = vadd.f32 %v1034, %v1091
        %v1093 = vpop.f32.mrf.mxu0
        %v1094 = vadd.f32 %v1036, %v1093
        %1095 = vmatmul.bf16.gmra.mxu0 %v874
        %v1096 = vpop.f32.mrf.mxu0
        %v1097 = vadd.f32 %v1039, %v1096
        %v1098 = vpop.f32.mrf.mxu0
        %v1099 = vadd.f32 %v1041, %v1098
        %1100 = vmatmul.bf16.gmra.mxu0 %v877
        %v1101 = vpop.f32.mrf.mxu0
        %v1102 = vadd.f32 %v1044, %v1101
        %v1103 = vpop.f32.mrf.mxu0
        %v1104 = vadd.f32 %v1046, %v1103
        %1105 = vmatmul.bf16.gmra.mxu0 %v880
        %v1106 = vpop.f32.mrf.mxu0
        %v1107 = vadd.f32 %v1049, %v1106
        %v1108 = vpop.f32.mrf.mxu0
        %v1109 = vadd.f32 %v1051, %v1108
        %1110 = vmatmul.bf16.gmra.mxu0 %v883
        %v1111 = vpop.f32.mrf.mxu0
        %v1112 = vadd.f32 %v1054, %v1111
        %v1113 = vpop.f32.mrf.mxu0
        %v1114 = vadd.f32 %v1056, %v1113
        %1115 = vmatmul.bf16.gmra.mxu0 %v886
        %v1116 = vpop.f32.mrf.mxu0
        %v1117 = vadd.f32 %v1059, %v1116
        %v1118 = vpop.f32.mrf.mxu0
        %v1119 = vadd.f32 %v1061, %v1118
        %1120 = vmatmul.bf16.gmra.mxu0 %v889
        %v1121 = vpop.f32.mrf.mxu0
        %v1122 = vadd.f32 %v1064, %v1121
        %v1123 = vpop.f32.mrf.mxu0
        %v1124 = vadd.f32 %v1066, %v1123
        %1125 = vmatmul.bf16.gmra.mxu0 %v892
        %v1126 = vpop.f32.mrf.mxu0
        %v1127 = vadd.f32 %v1069, %v1126
        %v1128 = vpop.f32.mrf.mxu0
        %v1129 = vadd.f32 %v1071, %v1128
        %1130 = vmatmul.bf16.gmra.mxu0 %v895
        %v1131 = vpop.f32.mrf.mxu0
        %v1132 = vadd.f32 %v1074, %v1131
        %v1133 = vpop.f32.mrf.mxu0
        %1134 = vdwg.mxu0
        %1135 = vmatpush.bf16.msra.mxu0 %v741
        %1136 = vmatpush.bf16.msra.mxu0 %v726
        %1137 = vmatpush.bf16.msra.mxu0 %v711
        %1138 = vmatpush.bf16.msra.mxu0 %v696
        %1139 = vmatpush.bf16.msra.mxu0 %v681
        %1140 = vmatpush.bf16.msra.mxu0 %v666
        %1141 = vmatpush.bf16.msra.mxu0 %v651
        %1142 = vmatpush.bf16.msra.mxu0 %v619
        %1143 = vmatmul.bf16.gmra.mxu0 %v836
        %v1144 = vpop.f32.mrf.mxu0
        %v1145 = vadd.f32 0.0, %v1144
        %v1146 = vpop.f32.mrf.mxu0
        %v1147 = vadd.f32 0.0, %v1146
        %1148 = vmatmul.bf16.gmra.mxu0 %v838
        %v1149 = vpop.f32.mrf.mxu0
        %v1150 = vadd.f32 0.0, %v1149
        %v1151 = vpop.f32.mrf.mxu0
        %v1152 = vadd.f32 0.0, %v1151
        %1153 = vmatmul.bf16.gmra.mxu0 %v840
        %v1154 = vpop.f32.mrf.mxu0
        %v1155 = vadd.f32 0.0, %v1154
        %v1156 = vpop.f32.mrf.mxu0
        %v1157 = vadd.f32 0.0, %v1156
        %1158 = vmatmul.bf16.gmra.mxu0 %v842
        %v1159 = vpop.f32.mrf.mxu0
        %v1160 = vadd.f32 0.0, %v1159
        %v1161 = vpop.f32.mrf.mxu0
        %v1162 = vadd.f32 0.0, %v1161
        %1163 = vmatmul.bf16.gmra.mxu0 %v844
        %v1164 = vpop.f32.mrf.mxu0
        %v1165 = vadd.f32 0.0, %v1164
        %v1166 = vpop.f32.mrf.mxu0
        %v1167 = vadd.f32 0.0, %v1166
        %1168 = vmatmul.bf16.gmra.mxu0 %v846
        %v1169 = vpop.f32.mrf.mxu0
        %v1170 = vadd.f32 0.0, %v1169
        %v1171 = vpop.f32.mrf.mxu0
        %v1172 = vadd.f32 0.0, %v1171
        %1173 = vmatmul.bf16.gmra.mxu0 %v848
        %v1174 = vpop.f32.mrf.mxu0
        %v1175 = vadd.f32 0.0, %v1174
        %v1176 = vpop.f32.mrf.mxu0
        %v1177 = vadd.f32 0.0, %v1176
        %1178 = vmatmul.bf16.gmra.mxu0 %v850
        %v1179 = vpop.f32.mrf.mxu0
        %v1180 = vadd.f32 0.0, %v1179
        %v1181 = vpop.f32.mrf.mxu0
        %v1182 = vadd.f32 0.0, %v1181
        %1183 = vmatmul.bf16.gmra.mxu0 %v852
        %v1184 = vpop.f32.mrf.mxu0
        %v1185 = vadd.f32 0.0, %v1184
        %v1186 = vpop.f32.mrf.mxu0
        %v1187 = vadd.f32 0.0, %v1186
        %1188 = vmatmul.bf16.gmra.mxu0 %v854
        %v1189 = vpop.f32.mrf.mxu0
        %v1190 = vadd.f32 0.0, %v1189
        %v1191 = vpop.f32.mrf.mxu0
        %1192 = vdwg.mxu0
        %1193 = vmatpush.bf16.msra.mxu0 0
        %1194 = vmatpush.bf16.msra.mxu0 0
        %1195 = vmatpush.bf16.msra.mxu0 0
        %1196 = vmatpush.bf16.msra.mxu0 0
        %1197 = vmatpush.bf16.msra.mxu0 0
        %1198 = vmatpush.bf16.msra.mxu0 0
        %1199 = vmatpush.bf16.msra.mxu0 %v901
        %1200 = vmatpush.bf16.msra.mxu0 %v756
        %1201 = vmatmul.bf16.gmra.mxu0 %v868
        %v1202 = vpop.f32.mrf.mxu0
        %v1203 = vadd.f32 %v1145, %v1202
        %v1204 = vpop.f32.mrf.mxu0
        %v1205 = vadd.f32 %v1147, %v1204
        %1206 = vmatmul.bf16.gmra.mxu0 %v871
        %v1207 = vpop.f32.mrf.mxu0
        %v1208 = vadd.f32 %v1150, %v1207
        %v1209 = vpop.f32.mrf.mxu0
        %v1210 = vadd.f32 %v1152, %v1209
        %1211 = vmatmul.bf16.gmra.mxu0 %v874
        %v1212 = vpop.f32.mrf.mxu0
        %v1213 = vadd.f32 %v1155, %v1212
        %v1214 = vpop.f32.mrf.mxu0
        %v1215 = vadd.f32 %v1157, %v1214
        %1216 = vmatmul.bf16.gmra.mxu0 %v877
        %v1217 = vpop.f32.mrf.mxu0
        %v1218 = vadd.f32 %v1160, %v1217
        %v1219 = vpop.f32.mrf.mxu0
        %v1220 = vadd.f32 %v1162, %v1219
        %1221 = vmatmul.bf16.gmra.mxu0 %v880
        %v1222 = vpop.f32.mrf.mxu0
        %v1223 = vadd.f32 %v1165, %v1222
        %v1224 = vpop.f32.mrf.mxu0
        %v1225 = vadd.f32 %v1167, %v1224
        %1226 = vmatmul.bf16.gmra.mxu0 %v883
        %v1227 = vpop.f32.mrf.mxu0
        %v1228 = vadd.f32 %v1170, %v1227
        %v1229 = vpop.f32.mrf.mxu0
        %v1230 = vadd.f32 %v1172, %v1229
        %1231 = vmatmul.bf16.gmra.mxu0 %v886
        %v1232 = vpop.f32.mrf.mxu0
        %v1233 = vadd.f32 %v1175, %v1232
        %v1234 = vpop.f32.mrf.mxu0
        %v1235 = vadd.f32 %v1177, %v1234
        %1236 = vmatmul.bf16.gmra.mxu0 %v889
        %v1237 = vpop.f32.mrf.mxu0
        %v1238 = vadd.f32 %v1180, %v1237
        %v1239 = vpop.f32.mrf.mxu0
        %v1240 = vadd.f32 %v1182, %v1239
        %1241 = vmatmul.bf16.gmra.mxu0 %v892
        %v1242 = vpop.f32.mrf.mxu0
        %v1243 = vadd.f32 %v1185, %v1242
        %v1244 = vpop.f32.mrf.mxu0
        %v1245 = vadd.f32 %v1187, %v1244
        %1246 = vmatmul.bf16.gmra.mxu0 %v895
        %v1247 = vpop.f32.mrf.mxu0
        %v1248 = vadd.f32 %v1190, %v1247
        %v1249 = vpop.f32.mrf.mxu0
        %1250 = vdwg.mxu0
        %v1251 = vunpack.c.l.bf16 %v620
        %v1252 = vunpack.c.l.bf16 %v621
        %v1253 = vunpack.c.l.bf16 %v622
        %v1254 = vunpack.c.h.bf16 %v620
        %v1255 = vunpack.c.h.bf16 %v621
        %v1256 = vunpack.c.h.bf16 %v622
        %v1257 = vmul.f32 %v971, %v1251
        %v1258 = vmul.f32 %v1087, %v1252
        %v1259 = vmul.f32 %v1203, %v1253
        %v1260 = vmul.f32 %v973, %v1254
        %v1261 = vmul.f32 %v1089, %v1255
        %v1262 = vmul.f32 %v1205, %v1256
        %v1263 = vadd.f32 %v1257, %v1260
        %v1264 = vrot.slane %v1263, 4
        %v1265 = vadd.f32 %v1263, %v1264
        %v1266 = vrot.slane %v1265, 2
        %v1267 = vadd.f32 %v1265, %v1266
        %v1268 = vrot.slane %v1267, 1
        %v1269 = vadd.f32 %v1267, %v1268
        %v1270 = vadd.f32 %v1258, %v1261
        %v1271 = vrot.slane %v1270, 4
        %v1272 = vadd.f32 %v1270, %v1271
        %v1273 = vrot.slane %v1272, 2
        %v1274 = vadd.f32 %v1272, %v1273
        %v1275 = vrot.slane %v1274, 1
        %v1276 = vadd.f32 %v1274, %v1275
        %v1277 = vadd.f32 %v1259, %v1262
        %v1278 = vrot.slane %v1277, 4
        %v1279 = vadd.f32 %v1277, %v1278
        %v1280 = vrot.slane %v1279, 2
        %v1281 = vadd.f32 %v1279, %v1280
        %v1282 = vrot.slane %v1281, 1
        %v1283 = vadd.f32 %v1281, %v1282
        %v1284 = vadd.f32 %v1016, %v1269
        %v1285 = vadd.f32 %v1132, %v1276
        %v1286 = vadd.f32 %v1248, %v1283
        %v1287 = vunpack.c.l.bf16 %v638
        %v1288 = vunpack.c.h.bf16 %v638
        %1297 = vrot.lane.b32.xlu0 %v1251, 127
        %v1298 = vpop.permute.xlu0 %1297
        %1299 = vrot.lane.b32.xlu0 %v1252, 127
        %v1300 = vpop.permute.xlu0 %1299
        %1301 = vrot.lane.b32.xlu0 %v1253, 127
        %v1302 = vpop.permute.xlu0 %1301
        %1303 = vrot.lane.b32.xlu0 %v1287, 127
        %v1304 = vpop.permute.xlu0 %1303
        %1305 = vrot.lane.b32.xlu0 %v1254, 127
        %v1306 = vpop.permute.xlu0 %1305
        %1307 = vrot.lane.b32.xlu0 %v1255, 127
        %v1308 = vpop.permute.xlu0 %1307
        %1309 = vrot.lane.b32.xlu0 %v1256, 127
        %v1310 = vpop.permute.xlu0 %1309
        %1311 = vrot.lane.b32.xlu0 %v1288, 127
        %v1312 = vpop.permute.xlu0 %1311
        %vm1313 = vcmask 1039360
        %v1314 = vsel %vm1313, %v1298, %v1300
        %v1315 = vsel %vm1313, %v1300, %v1302
        %v1316 = vsel %vm1313, %v1302, %v1304
        %v1317 = vsel %vm1313, %v1306, %v1308
        %v1318 = vsel %vm1313, %v1308, %v1310
        %v1319 = vsel %vm1313, %v1310, %v1312
        %v1326 = vmul.f32 %v976, %v1314
        %v1327 = vmul.f32 %v1092, %v1315
        %v1328 = vmul.f32 %v1208, %v1316
        %v1329 = vmul.f32 %v978, %v1317
        %v1330 = vmul.f32 %v1094, %v1318
        %v1331 = vmul.f32 %v1210, %v1319
        %v1332 = vadd.f32 %v1326, %v1329
        %v1333 = vrot.slane %v1332, 4
        %v1334 = vadd.f32 %v1332, %v1333
        %v1335 = vrot.slane %v1334, 2
        %v1336 = vadd.f32 %v1334, %v1335
        %v1337 = vrot.slane %v1336, 1
        %v1338 = vadd.f32 %v1336, %v1337
        %v1339 = vadd.f32 %v1327, %v1330
        %v1340 = vrot.slane %v1339, 4
        %v1341 = vadd.f32 %v1339, %v1340
        %v1342 = vrot.slane %v1341, 2
        %v1343 = vadd.f32 %v1341, %v1342
        %v1344 = vrot.slane %v1343, 1
        %v1345 = vadd.f32 %v1343, %v1344
        %v1346 = vadd.f32 %v1328, %v1331
        %v1347 = vrot.slane %v1346, 4
        %v1348 = vadd.f32 %v1346, %v1347
        %v1349 = vrot.slane %v1348, 2
        %v1350 = vadd.f32 %v1348, %v1349
        %v1351 = vrot.slane %v1350, 1
        %v1352 = vadd.f32 %v1350, %v1351
        %v1353 = vadd.f32 %v1284, %v1338
        %v1354 = vadd.f32 %v1285, %v1345
        %v1355 = vadd.f32 %v1286, %v1352
        %1356 = vrot.lane.b32.xlu0 %v1251, 126
        %v1357 = vpop.permute.xlu0 %1356
        %1358 = vrot.lane.b32.xlu0 %v1252, 126
        %v1359 = vpop.permute.xlu0 %1358
        %1360 = vrot.lane.b32.xlu0 %v1253, 126
        %v1361 = vpop.permute.xlu0 %1360
        %1362 = vrot.lane.b32.xlu0 %v1287, 126
        %v1363 = vpop.permute.xlu0 %1362
        %1364 = vrot.lane.b32.xlu0 %v1254, 126
        %v1365 = vpop.permute.xlu0 %1364
        %1366 = vrot.lane.b32.xlu0 %v1255, 126
        %v1367 = vpop.permute.xlu0 %1366
        %1368 = vrot.lane.b32.xlu0 %v1256, 126
        %v1369 = vpop.permute.xlu0 %1368
        %1370 = vrot.lane.b32.xlu0 %v1288, 126
        %v1371 = vpop.permute.xlu0 %1370
        %vm1372 = vcmask 1031168
        %v1373 = vsel %vm1372, %v1357, %v1359
        %v1374 = vsel %vm1372, %v1359, %v1361
        %v1375 = vsel %vm1372, %v1361, %v1363
        %v1376 = vsel %vm1372, %v1365, %v1367
        %v1377 = vsel %vm1372, %v1367, %v1369
        %v1378 = vsel %vm1372, %v1369, %v1371
        %v1385 = vmul.f32 %v981, %v1373
        %v1386 = vmul.f32 %v1097, %v1374
        %v1387 = vmul.f32 %v1213, %v1375
        %v1388 = vmul.f32 %v983, %v1376
        %v1389 = vmul.f32 %v1099, %v1377
        %v1390 = vmul.f32 %v1215, %v1378
        %v1391 = vadd.f32 %v1385, %v1388
        %v1392 = vrot.slane %v1391, 4
        %v1393 = vadd.f32 %v1391, %v1392
        %v1394 = vrot.slane %v1393, 2
        %v1395 = vadd.f32 %v1393, %v1394
        %v1396 = vrot.slane %v1395, 1
        %v1397 = vadd.f32 %v1395, %v1396
        %v1398 = vadd.f32 %v1386, %v1389
        %v1399 = vrot.slane %v1398, 4
        %v1400 = vadd.f32 %v1398, %v1399
        %v1401 = vrot.slane %v1400, 2
        %v1402 = vadd.f32 %v1400, %v1401
        %v1403 = vrot.slane %v1402, 1
        %v1404 = vadd.f32 %v1402, %v1403
        %v1405 = vadd.f32 %v1387, %v1390
        %v1406 = vrot.slane %v1405, 4
        %v1407 = vadd.f32 %v1405, %v1406
        %v1408 = vrot.slane %v1407, 2
        %v1409 = vadd.f32 %v1407, %v1408
        %v1410 = vrot.slane %v1409, 1
        %v1411 = vadd.f32 %v1409, %v1410
        %v1412 = vadd.f32 %v1353, %v1397
        %v1413 = vadd.f32 %v1354, %v1404
        %v1414 = vadd.f32 %v1355, %v1411
        %1415 = vrot.lane.b32.xlu0 %v1251, 110
        %v1416 = vpop.permute.xlu0 %1415
        %1417 = vrot.lane.b32.xlu0 %v1252, 110
        %v1418 = vpop.permute.xlu0 %1417
        %1419 = vrot.lane.b32.xlu0 %v1253, 110
        %v1420 = vpop.permute.xlu0 %1419
        %1421 = vrot.lane.b32.xlu0 %v1287, 110
        %v1422 = vpop.permute.xlu0 %1421
        %1423 = vrot.lane.b32.xlu0 %v1254, 110
        %v1424 = vpop.permute.xlu0 %1423
        %1425 = vrot.lane.b32.xlu0 %v1255, 110
        %v1426 = vpop.permute.xlu0 %1425
        %1427 = vrot.lane.b32.xlu0 %v1256, 110
        %v1428 = vpop.permute.xlu0 %1427
        %1429 = vrot.lane.b32.xlu0 %v1288, 110
        %v1430 = vpop.permute.xlu0 %1429
        %vm1431 = vcmask 900096
        %v1432 = vsel %vm1431, %v1416, %v1418
        %v1433 = vsel %vm1431, %v1418, %v1420
        %v1434 = vsel %vm1431, %v1420, %v1422
        %v1435 = vsel %vm1431, %v1424, %v1426
        %v1436 = vsel %vm1431, %v1426, %v1428
        %v1437 = vsel %vm1431, %v1428, %v1430
        %v1444 = vmul.f32 %v986, %v1432
        %v1445 = vmul.f32 %v1102, %v1433
        %v1446 = vmul.f32 %v1218, %v1434
        %v1447 = vmul.f32 %v988, %v1435
        %v1448 = vmul.f32 %v1104, %v1436
        %v1449 = vmul.f32 %v1220, %v1437
        %v1450 = vadd.f32 %v1444, %v1447
        %v1451 = vrot.slane %v1450, 4
        %v1452 = vadd.f32 %v1450, %v1451
        %v1453 = vrot.slane %v1452, 2
        %v1454 = vadd.f32 %v1452, %v1453
        %v1455 = vrot.slane %v1454, 1
        %v1456 = vadd.f32 %v1454, %v1455
        %v1457 = vadd.f32 %v1445, %v1448
        %v1458 = vrot.slane %v1457, 4
        %v1459 = vadd.f32 %v1457, %v1458
        %v1460 = vrot.slane %v1459, 2
        %v1461 = vadd.f32 %v1459, %v1460
        %v1462 = vrot.slane %v1461, 1
        %v1463 = vadd.f32 %v1461, %v1462
        %v1464 = vadd.f32 %v1446, %v1449
        %v1465 = vrot.slane %v1464, 4
        %v1466 = vadd.f32 %v1464, %v1465
        %v1467 = vrot.slane %v1466, 2
        %v1468 = vadd.f32 %v1466, %v1467
        %v1469 = vrot.slane %v1468, 1
        %v1470 = vadd.f32 %v1468, %v1469
        %v1471 = vadd.f32 %v1412, %v1456
        %v1472 = vadd.f32 %v1413, %v1463
        %v1473 = vadd.f32 %v1414, %v1470
        %1474 = vrot.lane.b32.xlu0 %v1251, 109
        %v1475 = vpop.permute.xlu0 %1474
        %1476 = vrot.lane.b32.xlu0 %v1252, 109
        %v1477 = vpop.permute.xlu0 %1476
        %1478 = vrot.lane.b32.xlu0 %v1253, 109
        %v1479 = vpop.permute.xlu0 %1478
        %1480 = vrot.lane.b32.xlu0 %v1287, 109
        %v1481 = vpop.permute.xlu0 %1480
        %1482 = vrot.lane.b32.xlu0 %v1254, 109
        %v1483 = vpop.permute.xlu0 %1482
        %1484 = vrot.lane.b32.xlu0 %v1255, 109
        %v1485 = vpop.permute.xlu0 %1484
        %1486 = vrot.lane.b32.xlu0 %v1256, 109
        %v1487 = vpop.permute.xlu0 %1486
        %1488 = vrot.lane.b32.xlu0 %v1288, 109
        %v1489 = vpop.permute.xlu0 %1488
        %vm1490 = vcmask 891904
        %v1491 = vsel %vm1490, %v1475, %v1477
        %v1492 = vsel %vm1490, %v1477, %v1479
        %v1493 = vsel %vm1490, %v1479, %v1481
        %v1494 = vsel %vm1490, %v1483, %v1485
        %v1495 = vsel %vm1490, %v1485, %v1487
        %v1496 = vsel %vm1490, %v1487, %v1489
        %v1503 = vmul.f32 %v991, %v1491
        %v1504 = vmul.f32 %v1107, %v1492
        %v1505 = vmul.f32 %v1223, %v1493
        %v1506 = vmul.f32 %v993, %v1494
        %v1507 = vmul.f32 %v1109, %v1495
        %v1508 = vmul.f32 %v1225, %v1496
        %v1509 = vadd.f32 %v1503, %v1506
        %v1510 = vrot.slane %v1509, 4
        %v1511 = vadd.f32 %v1509, %v1510
        %v1512 = vrot.slane %v1511, 2
        %v1513 = vadd.f32 %v1511, %v1512
        %v1514 = vrot.slane %v1513, 1
        %v1515 = vadd.f32 %v1513, %v1514
        %v1516 = vadd.f32 %v1504, %v1507
        %v1517 = vrot.slane %v1516, 4
        %v1518 = vadd.f32 %v1516, %v1517
        %v1519 = vrot.slane %v1518, 2
        %v1520 = vadd.f32 %v1518, %v1519
        %v1521 = vrot.slane %v1520, 1
        %v1522 = vadd.f32 %v1520, %v1521
        %v1523 = vadd.f32 %v1505, %v1508
        %v1524 = vrot.slane %v1523, 4
        %v1525 = vadd.f32 %v1523, %v1524
        %v1526 = vrot.slane %v1525, 2
        %v1527 = vadd.f32 %v1525, %v1526
        %v1528 = vrot.slane %v1527, 1
        %v1529 = vadd.f32 %v1527, %v1528
        %v1530 = vadd.f32 %v1471, %v1515
        %v1531 = vadd.f32 %v1472, %v1522
        %v1532 = vadd.f32 %v1473, %v1529
        %1533 = vrot.lane.b32.xlu0 %v1251, 108
        %v1534 = vpop.permute.xlu0 %1533
        %1535 = vrot.lane.b32.xlu0 %v1252, 108
        %v1536 = vpop.permute.xlu0 %1535
        %1537 = vrot.lane.b32.xlu0 %v1253, 108
        %v1538 = vpop.permute.xlu0 %1537
        %1539 = vrot.lane.b32.xlu0 %v1287, 108
        %v1540 = vpop.permute.xlu0 %1539
        %1541 = vrot.lane.b32.xlu0 %v1254, 108
        %v1542 = vpop.permute.xlu0 %1541
        %1543 = vrot.lane.b32.xlu0 %v1255, 108
        %v1544 = vpop.permute.xlu0 %1543
        %1545 = vrot.lane.b32.xlu0 %v1256, 108
        %v1546 = vpop.permute.xlu0 %1545
        %1547 = vrot.lane.b32.xlu0 %v1288, 108
        %v1548 = vpop.permute.xlu0 %1547
        %vm1549 = vcmask 883712
        %v1550 = vsel %vm1549, %v1534, %v1536
        %v1551 = vsel %vm1549, %v1536, %v1538
        %v1552 = vsel %vm1549, %v1538, %v1540
        %v1553 = vsel %vm1549, %v1542, %v1544
        %v1554 = vsel %vm1549, %v1544, %v1546
        %v1555 = vsel %vm1549, %v1546, %v1548
        %v1562 = vmul.f32 %v996, %v1550
        %v1563 = vmul.f32 %v1112, %v1551
        %v1564 = vmul.f32 %v1228, %v1552
        %v1565 = vmul.f32 %v998, %v1553
        %v1566 = vmul.f32 %v1114, %v1554
        %v1567 = vmul.f32 %v1230, %v1555
        %v1568 = vadd.f32 %v1562, %v1565
        %v1569 = vrot.slane %v1568, 4
        %v1570 = vadd.f32 %v1568, %v1569
        %v1571 = vrot.slane %v1570, 2
        %v1572 = vadd.f32 %v1570, %v1571
        %v1573 = vrot.slane %v1572, 1
        %v1574 = vadd.f32 %v1572, %v1573
        %v1575 = vadd.f32 %v1563, %v1566
        %v1576 = vrot.slane %v1575, 4
        %v1577 = vadd.f32 %v1575, %v1576
        %v1578 = vrot.slane %v1577, 2
        %v1579 = vadd.f32 %v1577, %v1578
        %v1580 = vrot.slane %v1579, 1
        %v1581 = vadd.f32 %v1579, %v1580
        %v1582 = vadd.f32 %v1564, %v1567
        %v1583 = vrot.slane %v1582, 4
        %v1584 = vadd.f32 %v1582, %v1583
        %v1585 = vrot.slane %v1584, 2
        %v1586 = vadd.f32 %v1584, %v1585
        %v1587 = vrot.slane %v1586, 1
        %v1588 = vadd.f32 %v1586, %v1587
        %v1589 = vadd.f32 %v1530, %v1574
        %v1590 = vadd.f32 %v1531, %v1581
        %v1591 = vadd.f32 %v1532, %v1588
        %1592 = vrot.lane.b32.xlu0 %v1251, 92
        %v1593 = vpop.permute.xlu0 %1592
        %1594 = vrot.lane.b32.xlu0 %v1252, 92
        %v1595 = vpop.permute.xlu0 %1594
        %1596 = vrot.lane.b32.xlu0 %v1253, 92
        %v1597 = vpop.permute.xlu0 %1596
        %1598 = vrot.lane.b32.xlu0 %v1287, 92
        %v1599 = vpop.permute.xlu0 %1598
        %1600 = vrot.lane.b32.xlu0 %v1254, 92
        %v1601 = vpop.permute.xlu0 %1600
        %1602 = vrot.lane.b32.xlu0 %v1255, 92
        %v1603 = vpop.permute.xlu0 %1602
        %1604 = vrot.lane.b32.xlu0 %v1256, 92
        %v1605 = vpop.permute.xlu0 %1604
        %1606 = vrot.lane.b32.xlu0 %v1288, 92
        %v1607 = vpop.permute.xlu0 %1606
        %vm1608 = vcmask 752640
        %v1609 = vsel %vm1608, %v1593, %v1595
        %v1610 = vsel %vm1608, %v1595, %v1597
        %v1611 = vsel %vm1608, %v1597, %v1599
        %v1612 = vsel %vm1608, %v1601, %v1603
        %v1613 = vsel %vm1608, %v1603, %v1605
        %v1614 = vsel %vm1608, %v1605, %v1607
        %v1621 = vmul.f32 %v1001, %v1609
        %v1622 = vmul.f32 %v1117, %v1610
        %v1623 = vmul.f32 %v1233, %v1611
        %v1624 = vmul.f32 %v1003, %v1612
        %v1625 = vmul.f32 %v1119, %v1613
        %v1626 = vmul.f32 %v1235, %v1614
        %v1627 = vadd.f32 %v1621, %v1624
        %v1628 = vrot.slane %v1627, 4
        %v1629 = vadd.f32 %v1627, %v1628
        %v1630 = vrot.slane %v1629, 2
        %v1631 = vadd.f32 %v1629, %v1630
        %v1632 = vrot.slane %v1631, 1
        %v1633 = vadd.f32 %v1631, %v1632
        %v1634 = vadd.f32 %v1622, %v1625
        %v1635 = vrot.slane %v1634, 4
        %v1636 = vadd.f32 %v1634, %v1635
        %v1637 = vrot.slane %v1636, 2
        %v1638 = vadd.f32 %v1636, %v1637
        %v1639 = vrot.slane %v1638, 1
        %v1640 = vadd.f32 %v1638, %v1639
        %v1641 = vadd.f32 %v1623, %v1626
        %v1642 = vrot.slane %v1641, 4
        %v1643 = vadd.f32 %v1641, %v1642
        %v1644 = vrot.slane %v1643, 2
        %v1645 = vadd.f32 %v1643, %v1644
        %v1646 = vrot.slane %v1645, 1
        %v1647 = vadd.f32 %v1645, %v1646
        %v1648 = vadd.f32 %v1589, %v1633
        %v1649 = vadd.f32 %v1590, %v1640
        %v1650 = vadd.f32 %v1591, %v1647
        %1651 = vrot.lane.b32.xlu0 %v1251, 91
        %v1652 = vpop.permute.xlu0 %1651
        %1653 = vrot.lane.b32.xlu0 %v1252, 91
        %v1654 = vpop.permute.xlu0 %1653
        %1655 = vrot.lane.b32.xlu0 %v1253, 91
        %v1656 = vpop.permute.xlu0 %1655
        %1657 = vrot.lane.b32.xlu0 %v1287, 91
        %v1658 = vpop.permute.xlu0 %1657
        %1659 = vrot.lane.b32.xlu0 %v1254, 91
        %v1660 = vpop.permute.xlu0 %1659
        %1661 = vrot.lane.b32.xlu0 %v1255, 91
        %v1662 = vpop.permute.xlu0 %1661
        %1663 = vrot.lane.b32.xlu0 %v1256, 91
        %v1664 = vpop.permute.xlu0 %1663
        %1665 = vrot.lane.b32.xlu0 %v1288, 91
        %v1666 = vpop.permute.xlu0 %1665
        %vm1667 = vcmask 744448
        %v1668 = vsel %vm1667, %v1652, %v1654
        %v1669 = vsel %vm1667, %v1654, %v1656
        %v1670 = vsel %vm1667, %v1656, %v1658
        %v1671 = vsel %vm1667, %v1660, %v1662
        %v1672 = vsel %vm1667, %v1662, %v1664
        %v1673 = vsel %vm1667, %v1664, %v1666
        %v1680 = vmul.f32 %v1006, %v1668
        %v1681 = vmul.f32 %v1122, %v1669
        %v1682 = vmul.f32 %v1238, %v1670
        %v1683 = vmul.f32 %v1008, %v1671
        %v1684 = vmul.f32 %v1124, %v1672
        %v1685 = vmul.f32 %v1240, %v1673
        %v1686 = vadd.f32 %v1680, %v1683
        %v1687 = vrot.slane %v1686, 4
        %v1688 = vadd.f32 %v1686, %v1687
        %v1689 = vrot.slane %v1688, 2
        %v1690 = vadd.f32 %v1688, %v1689
        %v1691 = vrot.slane %v1690, 1
        %v1692 = vadd.f32 %v1690, %v1691
        %v1693 = vadd.f32 %v1681, %v1684
        %v1694 = vrot.slane %v1693, 4
        %v1695 = vadd.f32 %v1693, %v1694
        %v1696 = vrot.slane %v1695, 2
        %v1697 = vadd.f32 %v1695, %v1696
        %v1698 = vrot.slane %v1697, 1
        %v1699 = vadd.f32 %v1697, %v1698
        %v1700 = vadd.f32 %v1682, %v1685
        %v1701 = vrot.slane %v1700, 4
        %v1702 = vadd.f32 %v1700, %v1701
        %v1703 = vrot.slane %v1702, 2
        %v1704 = vadd.f32 %v1702, %v1703
        %v1705 = vrot.slane %v1704, 1
        %v1706 = vadd.f32 %v1704, %v1705
        %v1707 = vadd.f32 %v1648, %v1692
        %v1708 = vadd.f32 %v1649, %v1699
        %v1709 = vadd.f32 %v1650, %v1706
        %1710 = vrot.lane.b32.xlu0 %v1251, 90
        %v1711 = vpop.permute.xlu0 %1710
        %1712 = vrot.lane.b32.xlu0 %v1252, 90
        %v1713 = vpop.permute.xlu0 %1712
        %1714 = vrot.lane.b32.xlu0 %v1253, 90
        %v1715 = vpop.permute.xlu0 %1714
        %1716 = vrot.lane.b32.xlu0 %v1287, 90
        %v1717 = vpop.permute.xlu0 %1716
        %1718 = vrot.lane.b32.xlu0 %v1254, 90
        %v1719 = vpop.permute.xlu0 %1718
        %1720 = vrot.lane.b32.xlu0 %v1255, 90
        %v1721 = vpop.permute.xlu0 %1720
        %1722 = vrot.lane.b32.xlu0 %v1256, 90
        %v1723 = vpop.permute.xlu0 %1722
        %1724 = vrot.lane.b32.xlu0 %v1288, 90
        %v1725 = vpop.permute.xlu0 %1724
        %vm1726 = vcmask 736256
        %v1727 = vsel %vm1726, %v1711, %v1713
        %v1728 = vsel %vm1726, %v1713, %v1715
        %v1729 = vsel %vm1726, %v1715, %v1717
        %v1730 = vsel %vm1726, %v1719, %v1721
        %v1731 = vsel %vm1726, %v1721, %v1723
        %v1732 = vsel %vm1726, %v1723, %v1725
        %v1739 = vmul.f32 %v1011, %v1727
        %v1740 = vmul.f32 %v1127, %v1728
        %v1741 = vmul.f32 %v1243, %v1729
        %v1742 = vmul.f32 %v1013, %v1730
        %v1743 = vmul.f32 %v1129, %v1731
        %v1744 = vmul.f32 %v1245, %v1732
        %v1745 = vadd.f32 %v1739, %v1742
        %v1746 = vrot.slane %v1745, 4
        %v1747 = vadd.f32 %v1745, %v1746
        %v1748 = vrot.slane %v1747, 2
        %v1749 = vadd.f32 %v1747, %v1748
        %v1750 = vrot.slane %v1749, 1
        %v1751 = vadd.f32 %v1749, %v1750
        %v1752 = vadd.f32 %v1740, %v1743
        %v1753 = vrot.slane %v1752, 4
        %v1754 = vadd.f32 %v1752, %v1753
        %v1755 = vrot.slane %v1754, 2
        %v1756 = vadd.f32 %v1754, %v1755
        %v1757 = vrot.slane %v1756, 1
        %v1758 = vadd.f32 %v1756, %v1757
        %v1759 = vadd.f32 %v1741, %v1744
        %v1760 = vrot.slane %v1759, 4
        %v1761 = vadd.f32 %v1759, %v1760
        %v1762 = vrot.slane %v1761, 2
        %v1763 = vadd.f32 %v1761, %v1762
        %v1764 = vrot.slane %v1763, 1
        %v1765 = vadd.f32 %v1763, %v1764
        %v1766 = vadd.f32 %v1707, %v1751
        %v1767 = vadd.f32 %v1708, %v1758
        %v1768 = vadd.f32 %v1709, %v1765
        %v1769 = vxor.u32 %v1766, 2147483648
        %v1770 = vxor.u32 %v1767, 2147483648
        %v1771 = vxor.u32 %v1768, 2147483648
        %v1772 = vmul.f32 %v1769, 1.442695
        %v1773 = vpow.pop %v1772
        %v1774 = vmul.f32 %v1770, 1.442695
        %v1775 = vpow.pop %v1774
        %v1776 = vmul.f32 %v1771, 1.442695
        %v1777 = vpow.pop %v1776
        %v1778 = vadd.f32 %v1773, 1.0
        %v1779 = vadd.f32 %v1775, 1.0
        %v1780 = vadd.f32 %v1777, 1.0
        %v1781 = vrcp.pop %v1778
        %v1782 = vmul.f32 %v1778, %v1781
        %v1783 = vsub.f32 1.0, %v1782
        %v1784 = vmul.f32 %v1781, %v1783
        %v1785 = vadd.f32 %v1781, %v1784
        %vm1786 = vweird.f32 %v1778
        %vm1787 = vweird.f32 %v1781
        %vm1788 = vmor %vm1786, %vm1787
        %v1789 = vsel %vm1788, %v1781, %v1785
        %v1790 = vand.u32 2147483647, %v1778
        %vm1791 = vcmp.eq.f32.partialorder %v1790, 8.507059e+37
        %v1792 = vand.u32 %v1778, 2147483648
        %v1793 = vor.u32 1.1754944e-38, %v1792
        %v1794 = vsel %vm1791, %v1793, %v1789
        %v1795 = vmul.f32 1.0, %v1794
        %v1796 = vrcp.pop %v1779
        %v1797 = vmul.f32 %v1779, %v1796
        %v1798 = vsub.f32 1.0, %v1797
        %v1799 = vmul.f32 %v1796, %v1798
        %v1800 = vadd.f32 %v1796, %v1799
        %vm1801 = vweird.f32 %v1779
        %vm1802 = vweird.f32 %v1796
        %vm1803 = vmor %vm1801, %vm1802
        %v1804 = vsel %vm1803, %v1796, %v1800
        %v1805 = vand.u32 2147483647, %v1779
        %vm1806 = vcmp.eq.f32.partialorder %v1805, 8.507059e+37
        %v1807 = vand.u32 %v1779, 2147483648
        %v1808 = vor.u32 1.1754944e-38, %v1807
        %v1809 = vsel %vm1806, %v1808, %v1804
        %v1810 = vmul.f32 1.0, %v1809
        %v1811 = vrcp.pop %v1780
        %v1812 = vmul.f32 %v1780, %v1811
        %v1813 = vsub.f32 1.0, %v1812
        %v1814 = vmul.f32 %v1811, %v1813
        %v1815 = vadd.f32 %v1811, %v1814
        %vm1816 = vweird.f32 %v1780
        %vm1817 = vweird.f32 %v1811
        %vm1818 = vmor %vm1816, %vm1817
        %v1819 = vsel %vm1818, %v1811, %v1815
        %v1820 = vand.u32 2147483647, %v1780
        %vm1821 = vcmp.eq.f32.partialorder %v1820, 8.507059e+37
        %v1822 = vand.u32 %v1780, 2147483648
        %v1823 = vor.u32 1.1754944e-38, %v1822
        %v1824 = vsel %vm1821, %v1823, %v1819
        %v1825 = vmul.f32 1.0, %v1824
        %v1829 = vrot.slane %v1810, 7
        %v1830 = vrot.slane %v1825, 6
        %v1831 = vsel %vm897, %v1795, %v1829
        %vm1832 = vcmask 1041408
        %v1833 = vsel %vm1832, %v1831, %v1830
        %v1835 = vlaneseq
        %vm1836 = vcmp.ge.s32.totalorder %v1835, 0
        %vm1837 = vcmp.lt.s32.totalorder %v1835, 384
        %vm1838 = vmand %vm1836, %vm1837
        %1839 = vst.msk [vmem:[%s581] sm:$0x7] %vm1838, %v1833
        %s1840 = smul.u32 3, %s19
        %p1841 = scmp.lt.s32.totalorder %s18, 1
        %s1842 = scalar_select %p1841, %s18, 1
        %p1843 = scmp.lt.s32.totalorder %s1840, 2
        %s1844 = scalar_select %p1843, %s1840, 2
        %s1845 = smul.addr %s1842, 3
        %s1846 = sadd.s32 %s1844, %s1845
        %s1847 = scalar_lea.vmem %s3, %s1846
        // Predicated region
        $region140: #{temporal_stabilization.1} parent=130 // pred_check
          %p1848 = pneg %p127
        $region141: #{temporal_stabilization.1} parent=130 // pred_check_branch
          %1850 = sbr.rel (%p1848) target = $region143
        $region142: #{temporal_stabilization.1} parent=130 // pred_region
          %s1851 = smul.u32 3, %s19
        $region143: #{temporal_stabilization.1} parent=130 // pred_fallthru
          _
      $region131: #{temporal_stabilization.1} parent=5 // pred_fallthru
        _
      %p1852 = scmp.le.s32.totalorder 2, %s9
      // Predicated region
      $region144: #{temporal_stabilization.1} parent=5 // pred_check
        %p1853 = pneg %p1852
      $region145: #{temporal_stabilization.1} parent=5 // pred_check_branch
        %1855 = sbr.rel (%p1853) target = $region147
      $region146: #{temporal_stabilization.1} parent=5 // pred_region
        %s1856 = ssub.s32 %s9, 2
        // Predicated region
        $region148: #{temporal_stabilization.1} parent=146 // pred_check
          %p1857 = pneg %p133
        $region149: #{temporal_stabilization.1} parent=146 // pred_check_branch
          %1859 = sbr.rel (%p1857) target = $region151
        $region150: #{temporal_stabilization.1} parent=146 // pred_region
          %s1860 = smul.u32 3, %s21
          %p1861 = scmp.lt.s32.totalorder %s20, 1
          %s1862 = scalar_select %p1861, %s20, 1
          %p1863 = scmp.lt.s32.totalorder %s1860, 2
          %s1864 = scalar_select %p1863, %s1860, 2
          %s1865 = smul.addr %s1862, 3
          %s1866 = sadd.s32 %s1864, %s1865
          %s1867 = scalar_lea.vmem %s3, %s1866
        $region151: #{temporal_stabilization.1} parent=146 // pred_fallthru
          _
      $region147: #{temporal_stabilization.1} parent=5 // pred_fallthru
        _
    $region6: #{temporal_stabilization.1} parent=1 // loop_footer
      %s13 = sadd.s32 1, %s9
    $region7: #{temporal_stabilization.1} parent=1 // loop_footer_branch
      %8 = sbr.rel target = $region3
    $region8: #{temporal_stabilization.1} parent=1 // loop_exit
      _

</llo_original>
